<compile_context>
chip_gen: v7x
topology: tpu7x:2x2x1
jax: 0.10.0
libtpu: 0.0.40
codegen_flags: <defaults>
</compile_context>

<pallas_src>
import functools
import math

import jax
import jax.numpy as jnp
from jax.experimental import pallas as pl
from jax.experimental.pallas import tpu as pltpu


# ----------------------------------------------------------------------------
# Pallas kernel: one full EncoderLayer applied to one batch element [S, D]
# ----------------------------------------------------------------------------
def encoder_layer_kernel(x_ref,
                         wqkv_ref, bqkv_ref,
                         wo_ref, bo_ref,
                         g1_ref, be1_ref,
                         w1_ref, b1_ref, w2_ref, b2_ref,
                         g2_ref, be2_ref,
                         out_ref,
                         *, num_heads):
    x = x_ref[0].astype(jnp.float32)                      # (S, D) f32
    S, D = x.shape
    H = num_heads
    dh = D // H
    scale = 1.0 / math.sqrt(dh)

    x_bf = x.astype(jnp.bfloat16)

    # ---- Fused QKV projection: one MXU launch with N = 3D, f32 accumulation --
    qkv = (jnp.dot(x_bf, wqkv_ref[...], preferred_element_type=jnp.float32)
           + bqkv_ref[...])                               # (S, 3D) f32
    q = qkv[:, :D] * scale                                # fold 1/sqrt(dh) into q
    k = qkv[:, D:2 * D]
    v = qkv[:, 2 * D:]

    # ---- Batched multi-head attention (leading head axis, no per-head loop) --
    def to_heads(t):                                      # (S, D) -> (H, S, dh) bf16
        return jnp.transpose(t.reshape(S, H, dh), (1, 0, 2)).astype(jnp.bfloat16)

    q3, k3, v3 = to_heads(q), to_heads(k), to_heads(v)

    s = jnp.einsum('hqd,hkd->hqk', q3, k3,
                   preferred_element_type=jnp.float32)    # (H, S, S) f32
    s = s - jnp.max(s, axis=-1, keepdims=True)
    p = jnp.exp(s)
    p = p * pl.reciprocal(jnp.sum(p, axis=-1, keepdims=True), approx=True)
    ctx = jnp.einsum('hqk,hkd->hqd', p.astype(jnp.bfloat16), v3,
                     preferred_element_type=jnp.float32)  # (H, S, dh) f32
    attn = jnp.transpose(ctx, (1, 0, 2)).reshape(S, D)    # (S, D)

    attn = (jnp.dot(attn.astype(jnp.bfloat16), wo_ref[...],
                    preferred_element_type=jnp.float32) + bo_ref[...])

    # ---- Residual + LayerNorm (one-pass statistics) --------------------------
    def layer_norm(t, g_ref, b_ref, eps=1e-5):
        mu = jnp.mean(t, axis=-1, keepdims=True)
        m2 = jnp.mean(t * t, axis=-1, keepdims=True)
        var = m2 - mu * mu
        return (t - mu) * jax.lax.rsqrt(var + eps) * g_ref[...] + b_ref[...]

    x1 = layer_norm(attn + x, g1_ref, be1_ref)            # res1

    # ---- Position-wise feed-forward ------------------------------------------
    h1 = jnp.maximum(
        jnp.dot(x1.astype(jnp.bfloat16), w1_ref[...],
                preferred_element_type=jnp.float32) + b1_ref[...], 0.0)   # (S, dff)
    ff = (jnp.dot(h1.astype(jnp.bfloat16), w2_ref[...],
                  preferred_element_type=jnp.float32) + b2_ref[...])      # (S, D)

    x2 = layer_norm(ff + x1, g2_ref, be2_ref)             # res2
    out_ref[0] = x2.astype(out_ref.dtype)


def encoder_layer(x, params, num_heads):
    """Apply one encoder layer. x: [B, S, D] float32."""
    B, S, D = x.shape
    dff = params["w1"].shape[1]
    names = ("wqkv", "bqkv", "wo", "bo", "g1", "be1",
             "w1", "b1", "w2", "b2", "g2", "be2")
    weight_args = [params[n] for n in names]

    def full_spec(a):
        nd = a.ndim
        return pl.BlockSpec(a.shape, lambda b, _nd=nd: (0,) * _nd)

    in_specs = ([pl.BlockSpec((1, S, D), lambda b: (b, 0, 0))]
                + [full_spec(a) for a in weight_args])

    # Advisory cost estimate for XLA's scheduler.
    flops = B * (2 * S * D * 3 * D        # fused QKV projection
                 + 2 * S * S * D          # attention scores (all heads)
                 + 2 * S * S * D          # attention context
                 + 2 * S * D * D          # output projection
                 + 4 * S * D * dff)       # FFN (two matmuls)
    transcendentals = B * num_heads * S * S
    bytes_accessed = (2 * x.size * x.dtype.itemsize
                      + sum(a.size * a.dtype.itemsize for a in weight_args))

    return pl.pallas_call(
        functools.partial(encoder_layer_kernel, num_heads=num_heads),
        out_shape=jax.ShapeDtypeStruct((B, S, D), jnp.float32),
        grid=(B,),
        in_specs=in_specs,
        out_specs=pl.BlockSpec((1, S, D), lambda b: (b, 0, 0)),
        compiler_params=pltpu.CompilerParams(
            dimension_semantics=("parallel",),
            vmem_limit_bytes=64 * 1024 * 1024),
        cost_estimate=pl.CostEstimate(
            flops=flops, transcendentals=transcendentals,
            bytes_accessed=bytes_accessed),
    )(x, *weight_args)


# ----------------------------------------------------------------------------
# Glue: embedding lookup + positional encoding (plain JAX), parameter init
# ----------------------------------------------------------------------------
def sinusoidal_pe(seq_len, d_model):
    pos = jnp.arange(seq_len, dtype=jnp.float32)[:, None]
    i = jnp.arange(d_model // 2, dtype=jnp.float32)[None, :]
    angle = pos / jnp.power(10000.0, (2.0 * i) / d_model)
    pe = jnp.zeros((seq_len, d_model), dtype=jnp.float32)
    pe = pe.at[:, 0::2].set(jnp.sin(angle))
    pe = pe.at[:, 1::2].set(jnp.cos(angle))
    return pe


def init_encoder_params(key, vocab_size, num_heads, d_model, num_layers, dff):
    keys = jax.random.split(key, 1 + num_layers)
    emb = jax.random.normal(keys[0], (vocab_size, d_model), jnp.float32) * 0.02
    layers = []
    for l in range(num_layers):
        ks = jax.random.split(keys[1 + l], 6)
        wq = jax.random.normal(ks[0], (d_model, d_model), jnp.float32) * 0.02
        wk = jax.random.normal(ks[1], (d_model, d_model), jnp.float32) * 0.02
        wv = jax.random.normal(ks[2], (d_model, d_model), jnp.float32) * 0.02
        p = {
            # Fused QKV weight [D, 3D]; matmul weights stored in bf16 (f32 accumulation).
            "wqkv": jnp.concatenate([wq, wk, wv], axis=1).astype(jnp.bfloat16),
            "bqkv": jnp.zeros((1, 3 * d_model), jnp.float32),
            "wo": (jax.random.normal(ks[3], (d_model, d_model), jnp.float32)
                   * 0.02).astype(jnp.bfloat16),
            "bo": jnp.zeros((1, d_model), jnp.float32),
            "g1": jnp.ones((1, d_model), jnp.float32),
            "be1": jnp.zeros((1, d_model), jnp.float32),
            "w1": (jax.random.normal(ks[4], (d_model, dff), jnp.float32)
                   * 0.02).astype(jnp.bfloat16),
            "b1": jnp.zeros((1, dff), jnp.float32),
            "w2": (jax.random.normal(ks[5], (dff, d_model), jnp.float32)
                   * 0.02).astype(jnp.bfloat16),
            "b2": jnp.zeros((1, d_model), jnp.float32),
            "g2": jnp.ones((1, d_model), jnp.float32),
            "be2": jnp.zeros((1, d_model), jnp.float32),
        }
        layers.append(p)
    return {"emb": emb, "layers": layers}


def encoder_forward(tokens, params, num_heads, d_model):
    # Embedder: embedding lookup scaled by sqrt(d_model)  (gather kept in plain JAX glue)
    x = params["emb"][tokens] * math.sqrt(d_model)        # [B, S, D] f32
    # PositionEncoder: additive sinusoidal PE
    x = x + sinusoidal_pe(tokens.shape[1], d_model)[None, :, :]
    # Encoder layers: one Pallas kernel per layer
    for layer_params in params["layers"]:
        x = encoder_layer(x, layer_params, num_heads)
    return x


# ----------------------------------------------------------------------------
if __name__ == "__main__":
    vocab_size = 50
    num_heads = 4
    d_model = 128        # lane-dense (multiple of 128)
    num_layers = 2
    dff = 256
    B, S = 2, 16         # S multiple of 8

    key = jax.random.PRNGKey(0)
    pkey, tkey = jax.random.split(key)
    params = init_encoder_params(pkey, vocab_size, num_heads, d_model, num_layers, dff)
    tokens = jax.random.randint(tkey, (B, S), 0, vocab_size, dtype=jnp.int32)

    out = encoder_forward(tokens, params, num_heads, d_model)
    jax.block_until_ready(out)
    assert out.shape == (B, S, d_model)
    assert bool(jnp.all(jnp.isfinite(out)))
    print("KERNEL_OK")
</pallas_src>

<mosaic_0001>
module attributes {stable_mosaic.version = 11 : i64} {
  func.func @encoder_layer_kernel(%arg0: i32, %arg1: memref<1x16x128xf32, #tpu.memory_space<vmem>>, %arg2: memref<128x384xbf16, #tpu.memory_space<vmem>>, %arg3: memref<1x384xf32, #tpu.memory_space<vmem>>, %arg4: memref<128x128xbf16, #tpu.memory_space<vmem>>, %arg5: memref<1x128xf32, #tpu.memory_space<vmem>>, %arg6: memref<1x128xf32, #tpu.memory_space<vmem>>, %arg7: memref<1x128xf32, #tpu.memory_space<vmem>>, %arg8: memref<128x256xbf16, #tpu.memory_space<vmem>>, %arg9: memref<1x256xf32, #tpu.memory_space<vmem>>, %arg10: memref<256x128xbf16, #tpu.memory_space<vmem>>, %arg11: memref<1x128xf32, #tpu.memory_space<vmem>>, %arg12: memref<1x128xf32, #tpu.memory_space<vmem>>, %arg13: memref<1x128xf32, #tpu.memory_space<vmem>>, %arg14: memref<1x16x128xf32, #tpu.memory_space<vmem>>) attributes {dimension_semantics = [#tpu.dimension_semantics<parallel>], iteration_bounds = array<i64: 2>, scalar_prefetch = 0 : i64, scratch_operands = 0 : i64, tpu.core_type = #tpu.core_type<tc>, window_params = [{transform_indices = @transform_0, window_bounds = array<i64: 1, 16, 128>}, {pipeline_mode = #tpu.pipeline_mode<synchronous>, transform_indices = @transform_1, window_bounds = array<i64: 128, 384>}, {pipeline_mode = #tpu.pipeline_mode<synchronous>, transform_indices = @transform_2, window_bounds = array<i64: 1, 384>}, {pipeline_mode = #tpu.pipeline_mode<synchronous>, transform_indices = @transform_3, window_bounds = array<i64: 128, 128>}, {pipeline_mode = #tpu.pipeline_mode<synchronous>, transform_indices = @transform_4, window_bounds = array<i64: 1, 128>}, {pipeline_mode = #tpu.pipeline_mode<synchronous>, transform_indices = @transform_5, window_bounds = array<i64: 1, 128>}, {pipeline_mode = #tpu.pipeline_mode<synchronous>, transform_indices = @transform_6, window_bounds = array<i64: 1, 128>}, {pipeline_mode = #tpu.pipeline_mode<synchronous>, transform_indices = @transform_7, window_bounds = array<i64: 128, 256>}, {pipeline_mode = #tpu.pipeline_mode<synchronous>, transform_indices = @transform_8, window_bounds = array<i64: 1, 256>}, {pipeline_mode = #tpu.pipeline_mode<synchronous>, transform_indices = @transform_9, window_bounds = array<i64: 256, 128>}, {pipeline_mode = #tpu.pipeline_mode<synchronous>, transform_indices = @transform_10, window_bounds = array<i64: 1, 128>}, {pipeline_mode = #tpu.pipeline_mode<synchronous>, transform_indices = @transform_11, window_bounds = array<i64: 1, 128>}, {pipeline_mode = #tpu.pipeline_mode<synchronous>, transform_indices = @transform_12, window_bounds = array<i64: 1, 128>}, {transform_indices = @transform_13, window_bounds = array<i64: 1, 16, 128>}]} {
    %c0 = arith.constant 0 : index
    %c0_0 = arith.constant 0 : index
    %c0_1 = arith.constant 0 : index
    %0 = vector.load %arg1[%c0, %c0_0, %c0_1] : memref<1x16x128xf32, #tpu.memory_space<vmem>>, vector<1x16x128xf32>
    %1 = vector.shape_cast %0 : vector<1x16x128xf32> to vector<16x128xf32>
    %2 = arith.truncf %1 : vector<16x128xf32> to vector<16x128xbf16>
    %c0_2 = arith.constant 0 : index
    %c0_3 = arith.constant 0 : index
    %3 = vector.load %arg2[%c0_2, %c0_3] : memref<128x384xbf16, #tpu.memory_space<vmem>>, vector<128x384xbf16>
    %cst = arith.constant dense<0.000000e+00> : vector<16x384xf32>
    %4 = tpu.matmul %2, %3, %cst {dimension_numbers = #tpu.dot_dimension_numbers<[1], [0], [0], [1], [0, 0, 1, 1], [], []>} : vector<16x128xbf16>, vector<128x384xbf16>, vector<16x384xf32> -> vector<16x384xf32>
    %c0_4 = arith.constant 0 : index
    %c0_5 = arith.constant 0 : index
    %5 = vector.load %arg3[%c0_4, %c0_5] : memref<1x384xf32, #tpu.memory_space<vmem>>, vector<1x384xf32>
    %6 = vector.broadcast %5 : vector<1x384xf32> to vector<16x384xf32>
    %7 = arith.addf %4, %6 : vector<16x384xf32>
    %8 = vector.extract_strided_slice %7 {offsets = [0, 0], sizes = [16, 128], strides = [1, 1]} : vector<16x384xf32> to vector<16x128xf32>
    %cst_6 = arith.constant 0.176776692 : f32
    %9 = vector.broadcast %cst_6 : f32 to vector<16x128xf32>
    %10 = arith.mulf %8, %9 : vector<16x128xf32>
    %11 = vector.extract_strided_slice %7 {offsets = [0, 128], sizes = [16, 128], strides = [1, 1]} : vector<16x384xf32> to vector<16x128xf32>
    %12 = vector.extract_strided_slice %7 {offsets = [0, 256], sizes = [16, 128], strides = [1, 1]} : vector<16x384xf32> to vector<16x128xf32>
    %13 = vector.shape_cast %10 : vector<16x128xf32> to vector<16x4x32xf32>
    %14 = tpu.transpose %13, [1, 0, 2] : vector<16x4x32xf32> -> vector<4x16x32xf32>
    %15 = arith.truncf %14 : vector<4x16x32xf32> to vector<4x16x32xbf16>
    %16 = vector.shape_cast %11 : vector<16x128xf32> to vector<16x4x32xf32>
    %17 = tpu.transpose %16, [1, 0, 2] : vector<16x4x32xf32> -> vector<4x16x32xf32>
    %18 = arith.truncf %17 : vector<4x16x32xf32> to vector<4x16x32xbf16>
    %19 = vector.shape_cast %12 : vector<16x128xf32> to vector<16x4x32xf32>
    %20 = tpu.transpose %19, [1, 0, 2] : vector<16x4x32xf32> -> vector<4x16x32xf32>
    %21 = arith.truncf %20 : vector<4x16x32xf32> to vector<4x16x32xbf16>
    "tpu.trace_start"() <{level = 10 : i32, message = "hqd,hkd->hqk"}> : () -> ()
    %cst_7 = arith.constant dense<0.000000e+00> : vector<4x16x16xf32>
    %22 = tpu.matmul %15, %18, %cst_7 {dimension_numbers = #tpu.dot_dimension_numbers<[2], [2], [1], [1], [0, 0, 0, 1, 1, 1], [0], [0]>} : vector<4x16x32xbf16>, vector<4x16x32xbf16>, vector<4x16x16xf32> -> vector<4x16x16xf32>
    "tpu.trace_stop"() : () -> ()
    %cst_8 = arith.constant dense<0xFF800000> : vector<4x16xf32>
    %23 = vector.multi_reduction <maximumf>, %22, %cst_8 [2] : vector<4x16x16xf32> to vector<4x16xf32>
    %24 = vector.shape_cast %23 : vector<4x16xf32> to vector<4x16x1xf32>
    %25 = vector.broadcast %24 : vector<4x16x1xf32> to vector<4x16x16xf32>
    %26 = arith.subf %22, %25 : vector<4x16x16xf32>
    %27 = math.exp %26 : vector<4x16x16xf32>
    %cst_9 = arith.constant dense<0.000000e+00> : vector<4x16xf32>
    %28 = vector.multi_reduction <add>, %27, %cst_9 [2] : vector<4x16x16xf32> to vector<4x16xf32>
    %29 = vector.shape_cast %28 : vector<4x16xf32> to vector<4x16x1xf32>
    %30 = tpu.reciprocal %29 {approx = true} : vector<4x16x1xf32> -> vector<4x16x1xf32>
    %31 = vector.broadcast %30 : vector<4x16x1xf32> to vector<4x16x16xf32>
    %32 = arith.mulf %27, %31 : vector<4x16x16xf32>
    %33 = arith.truncf %32 : vector<4x16x16xf32> to vector<4x16x16xbf16>
    "tpu.trace_start"() <{level = 10 : i32, message = "hqk,hkd->hqd"}> : () -> ()
    %cst_10 = arith.constant dense<0.000000e+00> : vector<4x16x32xf32>
    %34 = tpu.matmul %33, %21, %cst_10 {dimension_numbers = #tpu.dot_dimension_numbers<[2], [1], [1], [2], [0, 0, 0, 1, 1, 2], [0], [0]>} : vector<4x16x16xbf16>, vector<4x16x32xbf16>, vector<4x16x32xf32> -> vector<4x16x32xf32>
    "tpu.trace_stop"() : () -> ()
    %35 = tpu.transpose %34, [1, 0, 2] : vector<4x16x32xf32> -> vector<16x4x32xf32>
    %36 = vector.shape_cast %35 : vector<16x4x32xf32> to vector<16x128xf32>
    %37 = arith.truncf %36 : vector<16x128xf32> to vector<16x128xbf16>
    %c0_11 = arith.constant 0 : index
    %c0_12 = arith.constant 0 : index
    %38 = vector.load %arg4[%c0_11, %c0_12] : memref<128x128xbf16, #tpu.memory_space<vmem>>, vector<128x128xbf16>
    %cst_13 = arith.constant dense<0.000000e+00> : vector<16x128xf32>
    %39 = tpu.matmul %37, %38, %cst_13 {dimension_numbers = #tpu.dot_dimension_numbers<[1], [0], [0], [1], [0, 0, 1, 1], [], []>} : vector<16x128xbf16>, vector<128x128xbf16>, vector<16x128xf32> -> vector<16x128xf32>
    %c0_14 = arith.constant 0 : index
    %c0_15 = arith.constant 0 : index
    %40 = vector.load %arg5[%c0_14, %c0_15] : memref<1x128xf32, #tpu.memory_space<vmem>>, vector<1x128xf32>
    %41 = vector.broadcast %40 : vector<1x128xf32> to vector<16x128xf32>
    %42 = arith.addf %39, %41 : vector<16x128xf32>
    %43 = arith.addf %42, %1 : vector<16x128xf32>
    %cst_16 = arith.constant dense<0.000000e+00> : vector<16xf32>
    %44 = vector.multi_reduction <add>, %43, %cst_16 [1] : vector<16x128xf32> to vector<16xf32>
    %45 = vector.shape_cast %44 : vector<16xf32> to vector<16x1xf32>
    %cst_17 = arith.constant 1.280000e+02 : f32
    %46 = vector.broadcast %cst_17 : f32 to vector<16x1xf32>
    %47 = arith.divf %45, %46 : vector<16x1xf32>
    %48 = arith.mulf %43, %43 : vector<16x128xf32>
    %cst_18 = arith.constant dense<0.000000e+00> : vector<16xf32>
    %49 = vector.multi_reduction <add>, %48, %cst_18 [1] : vector<16x128xf32> to vector<16xf32>
    %50 = vector.shape_cast %49 : vector<16xf32> to vector<16x1xf32>
    %cst_19 = arith.constant 1.280000e+02 : f32
    %51 = vector.broadcast %cst_19 : f32 to vector<16x1xf32>
    %52 = arith.divf %50, %51 : vector<16x1xf32>
    %53 = arith.mulf %47, %47 : vector<16x1xf32>
    %54 = arith.subf %52, %53 : vector<16x1xf32>
    %55 = vector.broadcast %47 : vector<16x1xf32> to vector<16x128xf32>
    %56 = arith.subf %43, %55 : vector<16x128xf32>
    %cst_20 = arith.constant 9.99999974E-6 : f32
    %57 = vector.broadcast %cst_20 : f32 to vector<16x1xf32>
    %58 = arith.addf %54, %57 : vector<16x1xf32>
    %59 = math.rsqrt %58 : vector<16x1xf32>
    %60 = vector.broadcast %59 : vector<16x1xf32> to vector<16x128xf32>
    %61 = arith.mulf %56, %60 : vector<16x128xf32>
    %c0_21 = arith.constant 0 : index
    %c0_22 = arith.constant 0 : index
    %62 = vector.load %arg6[%c0_21, %c0_22] : memref<1x128xf32, #tpu.memory_space<vmem>>, vector<1x128xf32>
    %63 = vector.broadcast %62 : vector<1x128xf32> to vector<16x128xf32>
    %64 = arith.mulf %61, %63 : vector<16x128xf32>
    %c0_23 = arith.constant 0 : index
    %c0_24 = arith.constant 0 : index
    %65 = vector.load %arg7[%c0_23, %c0_24] : memref<1x128xf32, #tpu.memory_space<vmem>>, vector<1x128xf32>
    %66 = vector.broadcast %65 : vector<1x128xf32> to vector<16x128xf32>
    %67 = arith.addf %64, %66 : vector<16x128xf32>
    %68 = arith.truncf %67 : vector<16x128xf32> to vector<16x128xbf16>
    %c0_25 = arith.constant 0 : index
    %c0_26 = arith.constant 0 : index
    %69 = vector.load %arg8[%c0_25, %c0_26] : memref<128x256xbf16, #tpu.memory_space<vmem>>, vector<128x256xbf16>
    %cst_27 = arith.constant dense<0.000000e+00> : vector<16x256xf32>
    %70 = tpu.matmul %68, %69, %cst_27 {dimension_numbers = #tpu.dot_dimension_numbers<[1], [0], [0], [1], [0, 0, 1, 1], [], []>} : vector<16x128xbf16>, vector<128x256xbf16>, vector<16x256xf32> -> vector<16x256xf32>
    %c0_28 = arith.constant 0 : index
    %c0_29 = arith.constant 0 : index
    %71 = vector.load %arg9[%c0_28, %c0_29] : memref<1x256xf32, #tpu.memory_space<vmem>>, vector<1x256xf32>
    %72 = vector.broadcast %71 : vector<1x256xf32> to vector<16x256xf32>
    %73 = arith.addf %70, %72 : vector<16x256xf32>
    %cst_30 = arith.constant 0.000000e+00 : f32
    %74 = vector.broadcast %cst_30 : f32 to vector<16x256xf32>
    %75 = arith.maximumf %73, %74 : vector<16x256xf32>
    %76 = arith.truncf %75 : vector<16x256xf32> to vector<16x256xbf16>
    %c0_31 = arith.constant 0 : index
    %c0_32 = arith.constant 0 : index
    %77 = vector.load %arg10[%c0_31, %c0_32] : memref<256x128xbf16, #tpu.memory_space<vmem>>, vector<256x128xbf16>
    %cst_33 = arith.constant dense<0.000000e+00> : vector<16x128xf32>
    %78 = tpu.matmul %76, %77, %cst_33 {dimension_numbers = #tpu.dot_dimension_numbers<[1], [0], [0], [1], [0, 0, 1, 1], [], []>} : vector<16x256xbf16>, vector<256x128xbf16>, vector<16x128xf32> -> vector<16x128xf32>
    %c0_34 = arith.constant 0 : index
    %c0_35 = arith.constant 0 : index
    %79 = vector.load %arg11[%c0_34, %c0_35] : memref<1x128xf32, #tpu.memory_space<vmem>>, vector<1x128xf32>
    %80 = vector.broadcast %79 : vector<1x128xf32> to vector<16x128xf32>
    %81 = arith.addf %78, %80 : vector<16x128xf32>
    %82 = arith.addf %81, %67 : vector<16x128xf32>
    %cst_36 = arith.constant dense<0.000000e+00> : vector<16xf32>
    %83 = vector.multi_reduction <add>, %82, %cst_36 [1] : vector<16x128xf32> to vector<16xf32>
    %84 = vector.shape_cast %83 : vector<16xf32> to vector<16x1xf32>
    %cst_37 = arith.constant 1.280000e+02 : f32
    %85 = vector.broadcast %cst_37 : f32 to vector<16x1xf32>
    %86 = arith.divf %84, %85 : vector<16x1xf32>
    %87 = arith.mulf %82, %82 : vector<16x128xf32>
    %cst_38 = arith.constant dense<0.000000e+00> : vector<16xf32>
    %88 = vector.multi_reduction <add>, %87, %cst_38 [1] : vector<16x128xf32> to vector<16xf32>
    %89 = vector.shape_cast %88 : vector<16xf32> to vector<16x1xf32>
    %cst_39 = arith.constant 1.280000e+02 : f32
    %90 = vector.broadcast %cst_39 : f32 to vector<16x1xf32>
    %91 = arith.divf %89, %90 : vector<16x1xf32>
    %92 = arith.mulf %86, %86 : vector<16x1xf32>
    %93 = arith.subf %91, %92 : vector<16x1xf32>
    %94 = vector.broadcast %86 : vector<16x1xf32> to vector<16x128xf32>
    %95 = arith.subf %82, %94 : vector<16x128xf32>
    %cst_40 = arith.constant 9.99999974E-6 : f32
    %96 = vector.broadcast %cst_40 : f32 to vector<16x1xf32>
    %97 = arith.addf %93, %96 : vector<16x1xf32>
    %98 = math.rsqrt %97 : vector<16x1xf32>
    %99 = vector.broadcast %98 : vector<16x1xf32> to vector<16x128xf32>
    %100 = arith.mulf %95, %99 : vector<16x128xf32>
    %c0_41 = arith.constant 0 : index
    %c0_42 = arith.constant 0 : index
    %101 = vector.load %arg12[%c0_41, %c0_42] : memref<1x128xf32, #tpu.memory_space<vmem>>, vector<1x128xf32>
    %102 = vector.broadcast %101 : vector<1x128xf32> to vector<16x128xf32>
    %103 = arith.mulf %100, %102 : vector<16x128xf32>
    %c0_43 = arith.constant 0 : index
    %c0_44 = arith.constant 0 : index
    %104 = vector.load %arg13[%c0_43, %c0_44] : memref<1x128xf32, #tpu.memory_space<vmem>>, vector<1x128xf32>
    %105 = vector.broadcast %104 : vector<1x128xf32> to vector<16x128xf32>
    %106 = arith.addf %103, %105 : vector<16x128xf32>
    %c0_45 = arith.constant 0 : index
    %c0_46 = arith.constant 0 : index
    %c0_47 = arith.constant 0 : index
    %107 = vector.load %arg14[%c0_45, %c0_46, %c0_47] : memref<1x16x128xf32, #tpu.memory_space<vmem>>, vector<1x16x128xf32>
    %108 = vector.shape_cast %107 : vector<1x16x128xf32> to vector<16x128xf32>
    %109 = vector.shape_cast %106 : vector<16x128xf32> to vector<1x16x128xf32>
    tpu.vector_store %arg14[%c0_45, %c0_46, %c0_47], %109 {strides = array<i32>} : memref<1x16x128xf32, #tpu.memory_space<vmem>>, vector<1x16x128xf32>,
    return
  }
  func.func @transform_0(%arg0: i32) -> (i32, i32, i32) {
    %c0_i32 = arith.constant 0 : i32
    %c0_i32_0 = arith.constant 0 : i32
    %c0_i32_1 = arith.constant 0 : i32
    return %arg0, %c0_i32, %c0_i32_0 : i32, i32, i32
  }
  func.func @transform_1(%arg0: i32) -> (i32, i32) {
    %c0_i32 = arith.constant 0 : i32
    %c0_i32_0 = arith.constant 0 : i32
    %c0_i32_1 = arith.constant 0 : i32
    return %c0_i32, %c0_i32_0 : i32, i32
  }
  func.func @transform_2(%arg0: i32) -> (i32, i32) {
    %c0_i32 = arith.constant 0 : i32
    %c0_i32_0 = arith.constant 0 : i32
    %c0_i32_1 = arith.constant 0 : i32
    return %c0_i32, %c0_i32_0 : i32, i32
  }
  func.func @transform_3(%arg0: i32) -> (i32, i32) {
    %c0_i32 = arith.constant 0 : i32
    %c0_i32_0 = arith.constant 0 : i32
    %c0_i32_1 = arith.constant 0 : i32
    return %c0_i32, %c0_i32_0 : i32, i32
  }
  func.func @transform_4(%arg0: i32) -> (i32, i32) {
    %c0_i32 = arith.constant 0 : i32
    %c0_i32_0 = arith.constant 0 : i32
    %c0_i32_1 = arith.constant 0 : i32
    return %c0_i32, %c0_i32_0 : i32, i32
  }
  func.func @transform_5(%arg0: i32) -> (i32, i32) {
    %c0_i32 = arith.constant 0 : i32
    %c0_i32_0 = arith.constant 0 : i32
    %c0_i32_1 = arith.constant 0 : i32
    return %c0_i32, %c0_i32_0 : i32, i32
  }
  func.func @transform_6(%arg0: i32) -> (i32, i32) {
    %c0_i32 = arith.constant 0 : i32
    %c0_i32_0 = arith.constant 0 : i32
    %c0_i32_1 = arith.constant 0 : i32
    return %c0_i32, %c0_i32_0 : i32, i32
  }
  func.func @transform_7(%arg0: i32) -> (i32, i32) {
    %c0_i32 = arith.constant 0 : i32
    %c0_i32_0 = arith.constant 0 : i32
    %c0_i32_1 = arith.constant 0 : i32
    return %c0_i32, %c0_i32_0 : i32, i32
  }
  func.func @transform_8(%arg0: i32) -> (i32, i32) {
    %c0_i32 = arith.constant 0 : i32
    %c0_i32_0 = arith.constant 0 : i32
    %c0_i32_1 = arith.constant 0 : i32
    return %c0_i32, %c0_i32_0 : i32, i32
  }
  func.func @transform_9(%arg0: i32) -> (i32, i32) {
    %c0_i32 = arith.constant 0 : i32
    %c0_i32_0 = arith.constant 0 : i32
    %c0_i32_1 = arith.constant 0 : i32
    return %c0_i32, %c0_i32_0 : i32, i32
  }
  func.func @transform_10(%arg0: i32) -> (i32, i32) {
    %c0_i32 = arith.constant 0 : i32
    %c0_i32_0 = arith.constant 0 : i32
    %c0_i32_1 = arith.constant 0 : i32
    return %c0_i32, %c0_i32_0 : i32, i32
  }
  func.func @transform_11(%arg0: i32) -> (i32, i32) {
    %c0_i32 = arith.constant 0 : i32
    %c0_i32_0 = arith.constant 0 : i32
    %c0_i32_1 = arith.constant 0 : i32
    return %c0_i32, %c0_i32_0 : i32, i32
  }
  func.func @transform_12(%arg0: i32) -> (i32, i32) {
    %c0_i32 = arith.constant 0 : i32
    %c0_i32_0 = arith.constant 0 : i32
    %c0_i32_1 = arith.constant 0 : i32
    return %c0_i32, %c0_i32_0 : i32, i32
  }
  func.func @transform_13(%arg0: i32) -> (i32, i32, i32) {
    %c0_i32 = arith.constant 0 : i32
    %c0_i32_0 = arith.constant 0 : i32
    %c0_i32_1 = arith.constant 0 : i32
    return %arg0, %c0_i32, %c0_i32_0 : i32, i32, i32
  }
}

</mosaic_0001>

<llo_original>
// kernel: tpu_custom_call.1
$region0: #{tpu_custom_call.1}
  #allocation0 [shape = 'u32[]', space=smem, size = 0x4, offset = 0x4, fixed_abs, tag = 'smem constant byte address 0x4 - core index']
  #allocation1 [shape = 'u32[144,128]{1,0:T(1,128)}', space=vmem, size = 0x12000, scoped, tag = 'internal scratch']
  %s0 = inlined_call_operand.hbm [shape: f32[2,16,128], index: 0, kind: input, shape index: {}]
  %s1 = inlined_call_operand.hbm [shape: bf16[128,384], index: 1, kind: input, shape index: {}]
  %s2 = inlined_call_operand.hbm [shape: f32[1,384], index: 2, kind: input, shape index: {}]
  %s3 = inlined_call_operand.hbm [shape: bf16[128,128], index: 3, kind: input, shape index: {}]
  %s4 = inlined_call_operand.hbm [shape: f32[1,128], index: 4, kind: input, shape index: {}]
  %s5 = inlined_call_operand.hbm [shape: f32[1,128], index: 5, kind: input, shape index: {}]
  %s6 = inlined_call_operand.hbm [shape: f32[1,128], index: 6, kind: input, shape index: {}]
  %s7 = inlined_call_operand.hbm [shape: bf16[128,256], index: 7, kind: input, shape index: {}]
  %s8 = inlined_call_operand.hbm [shape: f32[1,256], index: 8, kind: input, shape index: {}]
  %s9 = inlined_call_operand.hbm [shape: bf16[256,128], index: 9, kind: input, shape index: {}]
  %s10 = inlined_call_operand.hbm [shape: f32[1,128], index: 10, kind: input, shape index: {}]
  %s11 = inlined_call_operand.hbm [shape: f32[1,128], index: 11, kind: input, shape index: {}]
  %s12 = inlined_call_operand.hbm [shape: f32[1,128], index: 12, kind: input, shape index: {}]
  %s13 = inlined_call_operand.hbm [shape: f32[2,16,128], index: 13, kind: output, shape index: {}]
  %s14 = sld [smem:[#allocation0]]
  $region137: #{tpu_custom_call.1} parent=0
    _
  %s16 = ssub.s32 1, %s14
  %s17 = scalar_select 0, %s16, %s14
  $region1: #{tpu_custom_call.1} parent=0
    #allocation2 [shape = 'u8[16384]{0}', space=vmem, size = 0x4000, scoped, tag = 'input window, operand 0']
    #allocation3 [shape = 's32[2]{0}', space=sflag, size = 0x8, scoped, tag = 'scoped memory for tpu_custom_call.1']
    #allocation4 [shape = 's32[2]{0}', space=sflag, size = 0x8, scoped, tag = 'scoped memory for tpu_custom_call.1']
    #allocation5 [shape = 'u8[98304]{0}', space=vmem, size = 0x18000, scoped, tag = 'input window, operand 1, single buffered']
    #allocation6 [shape = 's32[1]{0}', space=sflag, size = 0x4, scoped, tag = 'scoped memory for tpu_custom_call.1']
    #allocation7 [shape = 'u8[1536]{0}', space=vmem, size = 0x800, scoped, tag = 'input window, operand 2, single buffered']
    #allocation8 [shape = 'u8[32768]{0}', space=vmem, size = 0x8000, scoped, tag = 'input window, operand 3, single buffered']
    #allocation9 [shape = 's32[1]{0}', space=sflag, size = 0x4, scoped, tag = 'scoped memory for tpu_custom_call.1']
    #allocation10 [shape = 'u8[512]{0}', space=vmem, size = 0x400, scoped, tag = 'input window, operand 4, single buffered']
    #allocation11 [shape = 'u8[512]{0}', space=vmem, size = 0x400, scoped, tag = 'input window, operand 5, single buffered']
    #allocation12 [shape = 's32[1]{0}', space=sflag, size = 0x4, scoped, tag = 'scoped memory for tpu_custom_call.1']
    #allocation13 [shape = 'u8[512]{0}', space=vmem, size = 0x400, scoped, tag = 'input window, operand 6, single buffered']
    #allocation14 [shape = 'u8[65536]{0}', space=vmem, size = 0x10000, scoped, tag = 'input window, operand 7, single buffered']
    #allocation15 [shape = 's32[1]{0}', space=sflag, size = 0x4, scoped, tag = 'scoped memory for tpu_custom_call.1']
    #allocation16 [shape = 'u8[1024]{0}', space=vmem, size = 0x400, scoped, tag = 'input window, operand 8, single buffered']
    #allocation17 [shape = 'u8[65536]{0}', space=vmem, size = 0x10000, scoped, tag = 'input window, operand 9, single buffered']
    #allocation18 [shape = 's32[1]{0}', space=sflag, size = 0x4, scoped, tag = 'scoped memory for tpu_custom_call.1']
    #allocation19 [shape = 'u8[512]{0}', space=vmem, size = 0x400, scoped, tag = 'input window, operand 10, single buffered']
    #allocation20 [shape = 'u8[512]{0}', space=vmem, size = 0x400, scoped, tag = 'input window, operand 11, single buffered']
    #allocation21 [shape = 's32[1]{0}', space=sflag, size = 0x4, scoped, tag = 'scoped memory for tpu_custom_call.1']
    #allocation22 [shape = 'u8[512]{0}', space=vmem, size = 0x400, scoped, tag = 'input window, operand 12, single buffered']
    #allocation23 [shape = 'u8[16384]{0}', space=vmem, size = 0x4000, scoped, tag = 'output window, operand 0']
    %18 = vsyncpa [#allocation3], 0
    %s19 = scalar_lea.sflag [#allocation3], 1
    %20 = vsyncpa %s19, 0
    %21 = vsyncpa [#allocation6], 0
    %22 = vsyncpa [#allocation9], 0
    %23 = vsyncpa [#allocation12], 0
    %24 = vsyncpa [#allocation15], 0
    %25 = vsyncpa [#allocation18], 0
    %26 = vsyncpa [#allocation21], 0
    %27 = vsyncpa [#allocation4], 0
    %s28 = scalar_lea.sflag [#allocation4], 1
    %29 = vsyncpa %s28, 0
    loop: start=0, step=1, limit=4
    $region2: #{tpu_custom_call.1} parent=1 // loop_pre_header
      _
    $region3: #{tpu_custom_call.1} parent=1 // loop_header
      %s31 = sphi 0, %s35
      %p32 = scmp.ge.s32.totalorder %s31, 4
      %s41 = sphi 0, %s43
      %s44 = sphi 0, %s41
      %s45 = sphi 0, %s44
      %s61 = sphi 0, %s45
      %s65 = sphi 0, %s65
      %s67 = sphi 0, %s65
      %s68 = sphi 0, %s67
      %s82 = sphi 0, %s68
      %s86 = sphi 0, %s86
      %s88 = sphi 0, %s86
      %s89 = sphi 0, %s88
      %s103 = sphi 0, %s89
      %s107 = sphi 0, %s107
      %s109 = sphi 0, %s107
      %s110 = sphi 0, %s109
      %s124 = sphi 0, %s110
      %s128 = sphi 0, %s128
      %s130 = sphi 0, %s128
      %s131 = sphi 0, %s130
      %s145 = sphi 0, %s131
      %s149 = sphi 0, %s149
      %s151 = sphi 0, %s149
      %s152 = sphi 0, %s151
      %s166 = sphi 0, %s152
      %s170 = sphi 0, %s170
      %s172 = sphi 0, %s170
      %s173 = sphi 0, %s172
      %s187 = sphi 0, %s173
      %s191 = sphi 0, %s191
      %s193 = sphi 0, %s191
      %s194 = sphi 0, %s193
      %s208 = sphi 0, %s194
      %s212 = sphi 0, %s212
      %s214 = sphi 0, %s212
      %s215 = sphi 0, %s214
      %s229 = sphi 0, %s215
      %s233 = sphi 0, %s233
      %s235 = sphi 0, %s233
      %s236 = sphi 0, %s235
      %s250 = sphi 0, %s236
      %s254 = sphi 0, %s254
      %s256 = sphi 0, %s254
      %s257 = sphi 0, %s256
      %s271 = sphi 0, %s257
      %s275 = sphi 0, %s275
      %s277 = sphi 0, %s275
      %s278 = sphi 0, %s277
      %s292 = sphi 0, %s278
      %s296 = sphi 0, %s296
      %s298 = sphi 0, %s296
      %s299 = sphi 0, %s298
      %s313 = sphi 0, %s299
      %s319 = sphi 0, %s321
      %s322 = sphi 0, %s319
      %s323 = sphi 0, %s322
      %s339 = sphi 0, %s323
    $region4: #{tpu_custom_call.1} parent=1 // loop_header_branch
      %34 = sbr.rel (%p32) target = $region8
    $region5: #{tpu_custom_call.1} parent=1 // loop_body
      %s36 = ssub.s32 %s31, 1
      %s37 = ssub.s32 %s31, 2
      %s38 = sadd.s32 %s31, 1
      %s39 = ssub.s32 %s31, %s38
      %p40 = scmp.eq.s32.totalorder %s39, 0
      %s42 = sadd.s32 %s41, 1
      %s43 = scalar_select %p40, %s41, %s42
      %p46 = pneg %p40
      %p47 = scmp.eq.s32.totalorder %s31, 1
      %p48 = por %p46, %p47
      %p49 = scmp.ne.s32.totalorder %s41, %s44
      %p50 = scmp.eq.s32.totalorder %s31, 0
      %p51 = por %p49, %p50
      %p52 = scmp.ne.s32.totalorder %s41, %s44
      %p53 = scmp.eq.s32.totalorder %s36, 1
      %p54 = por %p52, %p53
      %p55 = scmp.ne.s32.totalorder %s44, %s45
      %p56 = scmp.eq.s32.totalorder %s36, 0
      %p57 = por %p55, %p56
      %p58 = scmp.ne.s32.totalorder %s44, %s45
      %p59 = scmp.eq.s32.totalorder %s37, 1
      %p60 = por %p58, %p59
      %p62 = scmp.ne.s32.totalorder %s45, %s61
      %p63 = scmp.eq.s32.totalorder %s37, 0
      %p64 = por %p62, %p63
      %s66 = sadd.s32 %s65, 1
      %p69 = scmp.eq.s32.totalorder %s31, 1
      %p70 = scmp.ne.s32.totalorder %s65, %s67
      %p71 = scmp.eq.s32.totalorder %s31, 0
      %p72 = por %p70, %p71
      %p73 = scmp.ne.s32.totalorder %s65, %s67
      %p74 = scmp.eq.s32.totalorder %s36, 1
      %p75 = por %p73, %p74
      %p76 = scmp.ne.s32.totalorder %s67, %s68
      %p77 = scmp.eq.s32.totalorder %s36, 0
      %p78 = por %p76, %p77
      %p79 = scmp.ne.s32.totalorder %s67, %s68
      %p80 = scmp.eq.s32.totalorder %s37, 1
      %p81 = por %p79, %p80
      %p83 = scmp.ne.s32.totalorder %s68, %s82
      %p84 = scmp.eq.s32.totalorder %s37, 0
      %p85 = por %p83, %p84
      %s87 = sadd.s32 %s86, 1
      %p90 = scmp.eq.s32.totalorder %s31, 1
      %p91 = scmp.ne.s32.totalorder %s86, %s88
      %p92 = scmp.eq.s32.totalorder %s31, 0
      %p93 = por %p91, %p92
      %p94 = scmp.ne.s32.totalorder %s86, %s88
      %p95 = scmp.eq.s32.totalorder %s36, 1
      %p96 = por %p94, %p95
      %p97 = scmp.ne.s32.totalorder %s88, %s89
      %p98 = scmp.eq.s32.totalorder %s36, 0
      %p99 = por %p97, %p98
      %p100 = scmp.ne.s32.totalorder %s88, %s89
      %p101 = scmp.eq.s32.totalorder %s37, 1
      %p102 = por %p100, %p101
      %p104 = scmp.ne.s32.totalorder %s89, %s103
      %p105 = scmp.eq.s32.totalorder %s37, 0
      %p106 = por %p104, %p105
      %s108 = sadd.s32 %s107, 1
      %p111 = scmp.eq.s32.totalorder %s31, 1
      %p112 = scmp.ne.s32.totalorder %s107, %s109
      %p113 = scmp.eq.s32.totalorder %s31, 0
      %p114 = por %p112, %p113
      %p115 = scmp.ne.s32.totalorder %s107, %s109
      %p116 = scmp.eq.s32.totalorder %s36, 1
      %p117 = por %p115, %p116
      %p118 = scmp.ne.s32.totalorder %s109, %s110
      %p119 = scmp.eq.s32.totalorder %s36, 0
      %p120 = por %p118, %p119
      %p121 = scmp.ne.s32.totalorder %s109, %s110
      %p122 = scmp.eq.s32.totalorder %s37, 1
      %p123 = por %p121, %p122
      %p125 = scmp.ne.s32.totalorder %s110, %s124
      %p126 = scmp.eq.s32.totalorder %s37, 0
      %p127 = por %p125, %p126
      %s129 = sadd.s32 %s128, 1
      %p132 = scmp.eq.s32.totalorder %s31, 1
      %p133 = scmp.ne.s32.totalorder %s128, %s130
      %p134 = scmp.eq.s32.totalorder %s31, 0
      %p135 = por %p133, %p134
      %p136 = scmp.ne.s32.totalorder %s128, %s130
      %p137 = scmp.eq.s32.totalorder %s36, 1
      %p138 = por %p136, %p137
      %p139 = scmp.ne.s32.totalorder %s130, %s131
      %p140 = scmp.eq.s32.totalorder %s36, 0
      %p141 = por %p139, %p140
      %p142 = scmp.ne.s32.totalorder %s130, %s131
      %p143 = scmp.eq.s32.totalorder %s37, 1
      %p144 = por %p142, %p143
      %p146 = scmp.ne.s32.totalorder %s131, %s145
      %p147 = scmp.eq.s32.totalorder %s37, 0
      %p148 = por %p146, %p147
      %s150 = sadd.s32 %s149, 1
      %p153 = scmp.eq.s32.totalorder %s31, 1
      %p154 = scmp.ne.s32.totalorder %s149, %s151
      %p155 = scmp.eq.s32.totalorder %s31, 0
      %p156 = por %p154, %p155
      %p157 = scmp.ne.s32.totalorder %s149, %s151
      %p158 = scmp.eq.s32.totalorder %s36, 1
      %p159 = por %p157, %p158
      %p160 = scmp.ne.s32.totalorder %s151, %s152
      %p161 = scmp.eq.s32.totalorder %s36, 0
      %p162 = por %p160, %p161
      %p163 = scmp.ne.s32.totalorder %s151, %s152
      %p164 = scmp.eq.s32.totalorder %s37, 1
      %p165 = por %p163, %p164
      %p167 = scmp.ne.s32.totalorder %s152, %s166
      %p168 = scmp.eq.s32.totalorder %s37, 0
      %p169 = por %p167, %p168
      %s171 = sadd.s32 %s170, 1
      %p174 = scmp.eq.s32.totalorder %s31, 1
      %p175 = scmp.ne.s32.totalorder %s170, %s172
      %p176 = scmp.eq.s32.totalorder %s31, 0
      %p177 = por %p175, %p176
      %p178 = scmp.ne.s32.totalorder %s170, %s172
      %p179 = scmp.eq.s32.totalorder %s36, 1
      %p180 = por %p178, %p179
      %p181 = scmp.ne.s32.totalorder %s172, %s173
      %p182 = scmp.eq.s32.totalorder %s36, 0
      %p183 = por %p181, %p182
      %p184 = scmp.ne.s32.totalorder %s172, %s173
      %p185 = scmp.eq.s32.totalorder %s37, 1
      %p186 = por %p184, %p185
      %p188 = scmp.ne.s32.totalorder %s173, %s187
      %p189 = scmp.eq.s32.totalorder %s37, 0
      %p190 = por %p188, %p189
      %s192 = sadd.s32 %s191, 1
      %p195 = scmp.eq.s32.totalorder %s31, 1
      %p196 = scmp.ne.s32.totalorder %s191, %s193
      %p197 = scmp.eq.s32.totalorder %s31, 0
      %p198 = por %p196, %p197
      %p199 = scmp.ne.s32.totalorder %s191, %s193
      %p200 = scmp.eq.s32.totalorder %s36, 1
      %p201 = por %p199, %p200
      %p202 = scmp.ne.s32.totalorder %s193, %s194
      %p203 = scmp.eq.s32.totalorder %s36, 0
      %p204 = por %p202, %p203
      %p205 = scmp.ne.s32.totalorder %s193, %s194
      %p206 = scmp.eq.s32.totalorder %s37, 1
      %p207 = por %p205, %p206
      %p209 = scmp.ne.s32.totalorder %s194, %s208
      %p210 = scmp.eq.s32.totalorder %s37, 0
      %p211 = por %p209, %p210
      %s213 = sadd.s32 %s212, 1
      %p216 = scmp.eq.s32.totalorder %s31, 1
      %p217 = scmp.ne.s32.totalorder %s212, %s214
      %p218 = scmp.eq.s32.totalorder %s31, 0
      %p219 = por %p217, %p218
      %p220 = scmp.ne.s32.totalorder %s212, %s214
      %p221 = scmp.eq.s32.totalorder %s36, 1
      %p222 = por %p220, %p221
      %p223 = scmp.ne.s32.totalorder %s214, %s215
      %p224 = scmp.eq.s32.totalorder %s36, 0
      %p225 = por %p223, %p224
      %p226 = scmp.ne.s32.totalorder %s214, %s215
      %p227 = scmp.eq.s32.totalorder %s37, 1
      %p228 = por %p226, %p227
      %p230 = scmp.ne.s32.totalorder %s215, %s229
      %p231 = scmp.eq.s32.totalorder %s37, 0
      %p232 = por %p230, %p231
      %s234 = sadd.s32 %s233, 1
      %p237 = scmp.eq.s32.totalorder %s31, 1
      %p238 = scmp.ne.s32.totalorder %s233, %s235
      %p239 = scmp.eq.s32.totalorder %s31, 0
      %p240 = por %p238, %p239
      %p241 = scmp.ne.s32.totalorder %s233, %s235
      %p242 = scmp.eq.s32.totalorder %s36, 1
      %p243 = por %p241, %p242
      %p244 = scmp.ne.s32.totalorder %s235, %s236
      %p245 = scmp.eq.s32.totalorder %s36, 0
      %p246 = por %p244, %p245
      %p247 = scmp.ne.s32.totalorder %s235, %s236
      %p248 = scmp.eq.s32.totalorder %s37, 1
      %p249 = por %p247, %p248
      %p251 = scmp.ne.s32.totalorder %s236, %s250
      %p252 = scmp.eq.s32.totalorder %s37, 0
      %p253 = por %p251, %p252
      %s255 = sadd.s32 %s254, 1
      %p258 = scmp.eq.s32.totalorder %s31, 1
      %p259 = scmp.ne.s32.totalorder %s254, %s256
      %p260 = scmp.eq.s32.totalorder %s31, 0
      %p261 = por %p259, %p260
      %p262 = scmp.ne.s32.totalorder %s254, %s256
      %p263 = scmp.eq.s32.totalorder %s36, 1
      %p264 = por %p262, %p263
      %p265 = scmp.ne.s32.totalorder %s256, %s257
      %p266 = scmp.eq.s32.totalorder %s36, 0
      %p267 = por %p265, %p266
      %p268 = scmp.ne.s32.totalorder %s256, %s257
      %p269 = scmp.eq.s32.totalorder %s37, 1
      %p270 = por %p268, %p269
      %p272 = scmp.ne.s32.totalorder %s257, %s271
      %p273 = scmp.eq.s32.totalorder %s37, 0
      %p274 = por %p272, %p273
      %s276 = sadd.s32 %s275, 1
      %p279 = scmp.eq.s32.totalorder %s31, 1
      %p280 = scmp.ne.s32.totalorder %s275, %s277
      %p281 = scmp.eq.s32.totalorder %s31, 0
      %p282 = por %p280, %p281
      %p283 = scmp.ne.s32.totalorder %s275, %s277
      %p284 = scmp.eq.s32.totalorder %s36, 1
      %p285 = por %p283, %p284
      %p286 = scmp.ne.s32.totalorder %s277, %s278
      %p287 = scmp.eq.s32.totalorder %s36, 0
      %p288 = por %p286, %p287
      %p289 = scmp.ne.s32.totalorder %s277, %s278
      %p290 = scmp.eq.s32.totalorder %s37, 1
      %p291 = por %p289, %p290
      %p293 = scmp.ne.s32.totalorder %s278, %s292
      %p294 = scmp.eq.s32.totalorder %s37, 0
      %p295 = por %p293, %p294
      %s297 = sadd.s32 %s296, 1
      %p300 = scmp.eq.s32.totalorder %s31, 1
      %p301 = scmp.ne.s32.totalorder %s296, %s298
      %p302 = scmp.eq.s32.totalorder %s31, 0
      %p303 = por %p301, %p302
      %p304 = scmp.ne.s32.totalorder %s296, %s298
      %p305 = scmp.eq.s32.totalorder %s36, 1
      %p306 = por %p304, %p305
      %p307 = scmp.ne.s32.totalorder %s298, %s299
      %p308 = scmp.eq.s32.totalorder %s36, 0
      %p309 = por %p307, %p308
      %p310 = scmp.ne.s32.totalorder %s298, %s299
      %p311 = scmp.eq.s32.totalorder %s37, 1
      %p312 = por %p310, %p311
      %p314 = scmp.ne.s32.totalorder %s299, %s313
      %p315 = scmp.eq.s32.totalorder %s37, 0
      %p316 = por %p314, %p315
      %s317 = ssub.s32 %s31, %s38
      %p318 = scmp.eq.s32.totalorder %s317, 0
      %s320 = sadd.s32 %s319, 1
      %s321 = scalar_select %p318, %s319, %s320
      %p324 = pneg %p318
      %p325 = scmp.eq.s32.totalorder %s31, 1
      %p326 = por %p324, %p325
      %p327 = scmp.ne.s32.totalorder %s319, %s322
      %p328 = scmp.eq.s32.totalorder %s31, 0
      %p329 = por %p327, %p328
      %p330 = scmp.ne.s32.totalorder %s319, %s322
      %p331 = scmp.eq.s32.totalorder %s36, 1
      %p332 = por %p330, %p331
      %p333 = scmp.ne.s32.totalorder %s322, %s323
      %p334 = scmp.eq.s32.totalorder %s36, 0
      %p335 = por %p333, %p334
      %p336 = scmp.ne.s32.totalorder %s322, %s323
      %p337 = scmp.eq.s32.totalorder %s37, 1
      %p338 = por %p336, %p337
      %p340 = scmp.ne.s32.totalorder %s323, %s339
      %p341 = scmp.eq.s32.totalorder %s37, 0
      %p342 = por %p340, %p341
      %p343 = scmp.le.s32.totalorder 1, %s31
      %p344 = scmp.lt.s32.totalorder %s31, 3
      %p345 = pnand %p343, %p344
      %p346 = pneg %p345
      // Predicated region
      $region9: #{tpu_custom_call.1} parent=5 // pred_check
        _
      $region10: #{tpu_custom_call.1} parent=5 // pred_check_branch
        %348 = sbr.rel (%p345) target = $region12
      $region11: #{tpu_custom_call.1} parent=5 // pred_region
        %s349 = ssub.s32 %s31, 1
        // Predicated region
        $region13: #{tpu_custom_call.1} parent=11 // pred_check
          %p350 = pneg %p78
        $region14: #{tpu_custom_call.1} parent=11 // pred_check_branch
          %352 = sbr.rel (%p350) target = $region16
        $region15: #{tpu_custom_call.1} parent=11 // pred_region
          %s354 = ssub.s32 3072, 3072
          %355 = vsyncadd [#allocation6], %s354
          %s356 = sshll.u32 [#allocation5], 4
          %s357 = int_to_ptr.vmem [resolvable:$true] %s356
          %362 = dma.hbm_to_vmem [thread:$0]  %s1, 3072, %s357, [#allocation6], 192, 192, 12
        $region16: #{tpu_custom_call.1} parent=11 // pred_fallthru
          _
        // Predicated region
        $region17: #{tpu_custom_call.1} parent=11 // pred_check
          %p363 = pneg %p99
        $region18: #{tpu_custom_call.1} parent=11 // pred_check_branch
          %365 = sbr.rel (%p363) target = $region20
        $region19: #{tpu_custom_call.1} parent=11 // pred_region
          %s367 = ssub.s32 48, 48
          %368 = vsyncadd [#allocation6], %s367
          %s370 = sshll.u32 [#allocation7], 4
          %s371 = int_to_ptr.vmem [resolvable:$true] %s370
          %373 = dma.hbm_to_vmem [thread:$0]  %s2, 48, %s371, [#allocation6]
        $region20: #{tpu_custom_call.1} parent=11 // pred_fallthru
          _
        // Predicated region
        $region21: #{tpu_custom_call.1} parent=11 // pred_check
          %p374 = pneg %p120
        $region22: #{tpu_custom_call.1} parent=11 // pred_check_branch
          %376 = sbr.rel (%p374) target = $region24
        $region23: #{tpu_custom_call.1} parent=11 // pred_region
          %s378 = ssub.s32 1024, 1024
          %379 = vsyncadd [#allocation9], %s378
          %s380 = sshll.u32 [#allocation8], 4
          %s381 = int_to_ptr.vmem [resolvable:$true] %s380
          %386 = dma.hbm_to_vmem [thread:$0]  %s3, 1024, %s381, [#allocation9], 64, 64, 4
        $region24: #{tpu_custom_call.1} parent=11 // pred_fallthru
          _
        // Predicated region
        $region25: #{tpu_custom_call.1} parent=11 // pred_check
          %p387 = pneg %p141
        $region26: #{tpu_custom_call.1} parent=11 // pred_check_branch
          %389 = sbr.rel (%p387) target = $region28
        $region27: #{tpu_custom_call.1} parent=11 // pred_region
          %s391 = ssub.s32 16, 16
          %392 = vsyncadd [#allocation9], %s391
          %s394 = sshll.u32 [#allocation10], 4
          %s395 = int_to_ptr.vmem [resolvable:$true] %s394
          %397 = dma.hbm_to_vmem [thread:$0]  %s4, 16, %s395, [#allocation9]
        $region28: #{tpu_custom_call.1} parent=11 // pred_fallthru
          _
        // Predicated region
        $region29: #{tpu_custom_call.1} parent=11 // pred_check
          %p398 = pneg %p162
        $region30: #{tpu_custom_call.1} parent=11 // pred_check_branch
          %400 = sbr.rel (%p398) target = $region32
        $region31: #{tpu_custom_call.1} parent=11 // pred_region
          %s402 = ssub.s32 16, 16
          %403 = vsyncadd [#allocation12], %s402
          %s405 = sshll.u32 [#allocation11], 4
          %s406 = int_to_ptr.vmem [resolvable:$true] %s405
          %408 = dma.hbm_to_vmem [thread:$0]  %s5, 16, %s406, [#allocation12]
        $region32: #{tpu_custom_call.1} parent=11 // pred_fallthru
          _
        // Predicated region
        $region33: #{tpu_custom_call.1} parent=11 // pred_check
          %p409 = pneg %p183
        $region34: #{tpu_custom_call.1} parent=11 // pred_check_branch
          %411 = sbr.rel (%p409) target = $region36
        $region35: #{tpu_custom_call.1} parent=11 // pred_region
          %s413 = ssub.s32 16, 16
          %414 = vsyncadd [#allocation12], %s413
          %s416 = sshll.u32 [#allocation13], 4
          %s417 = int_to_ptr.vmem [resolvable:$true] %s416
          %419 = dma.hbm_to_vmem [thread:$0]  %s6, 16, %s417, [#allocation12]
        $region36: #{tpu_custom_call.1} parent=11 // pred_fallthru
          _
        // Predicated region
        $region37: #{tpu_custom_call.1} parent=11 // pred_check
          %p420 = pneg %p204
        $region38: #{tpu_custom_call.1} parent=11 // pred_check_branch
          %422 = sbr.rel (%p420) target = $region40
        $region39: #{tpu_custom_call.1} parent=11 // pred_region
          %s424 = ssub.s32 2048, 2048
          %425 = vsyncadd [#allocation15], %s424
          %s426 = sshll.u32 [#allocation14], 4
          %s427 = int_to_ptr.vmem [resolvable:$true] %s426
          %432 = dma.hbm_to_vmem [thread:$0]  %s7, 2048, %s427, [#allocation15], 128, 128, 8
        $region40: #{tpu_custom_call.1} parent=11 // pred_fallthru
          _
        // Predicated region
        $region41: #{tpu_custom_call.1} parent=11 // pred_check
          %p433 = pneg %p225
        $region42: #{tpu_custom_call.1} parent=11 // pred_check_branch
          %435 = sbr.rel (%p433) target = $region44
        $region43: #{tpu_custom_call.1} parent=11 // pred_region
          %s437 = ssub.s32 32, 32
          %438 = vsyncadd [#allocation15], %s437
          %s440 = sshll.u32 [#allocation16], 4
          %s441 = int_to_ptr.vmem [resolvable:$true] %s440
          %443 = dma.hbm_to_vmem [thread:$0]  %s8, 32, %s441, [#allocation15]
        $region44: #{tpu_custom_call.1} parent=11 // pred_fallthru
          _
        // Predicated region
        $region45: #{tpu_custom_call.1} parent=11 // pred_check
          %p444 = pneg %p246
        $region46: #{tpu_custom_call.1} parent=11 // pred_check_branch
          %446 = sbr.rel (%p444) target = $region48
        $region47: #{tpu_custom_call.1} parent=11 // pred_region
          %s448 = ssub.s32 2048, 2048
          %449 = vsyncadd [#allocation18], %s448
          %s450 = sshll.u32 [#allocation17], 4
          %s451 = int_to_ptr.vmem [resolvable:$true] %s450
          %456 = dma.hbm_to_vmem [thread:$0]  %s9, 2048, %s451, [#allocation18], 64, 64, 4
        $region48: #{tpu_custom_call.1} parent=11 // pred_fallthru
          _
        // Predicated region
        $region49: #{tpu_custom_call.1} parent=11 // pred_check
          %p457 = pneg %p267
        $region50: #{tpu_custom_call.1} parent=11 // pred_check_branch
          %459 = sbr.rel (%p457) target = $region52
        $region51: #{tpu_custom_call.1} parent=11 // pred_region
          %s461 = ssub.s32 16, 16
          %462 = vsyncadd [#allocation18], %s461
          %s464 = sshll.u32 [#allocation19], 4
          %s465 = int_to_ptr.vmem [resolvable:$true] %s464
          %467 = dma.hbm_to_vmem [thread:$0]  %s10, 16, %s465, [#allocation18]
        $region52: #{tpu_custom_call.1} parent=11 // pred_fallthru
          _
        // Predicated region
        $region53: #{tpu_custom_call.1} parent=11 // pred_check
          %p468 = pneg %p288
        $region54: #{tpu_custom_call.1} parent=11 // pred_check_branch
          %470 = sbr.rel (%p468) target = $region56
        $region55: #{tpu_custom_call.1} parent=11 // pred_region
          %s472 = ssub.s32 16, 16
          %473 = vsyncadd [#allocation21], %s472
          %s475 = sshll.u32 [#allocation20], 4
          %s476 = int_to_ptr.vmem [resolvable:$true] %s475
          %478 = dma.hbm_to_vmem [thread:$0]  %s11, 16, %s476, [#allocation21]
        $region56: #{tpu_custom_call.1} parent=11 // pred_fallthru
          _
        // Predicated region
        $region57: #{tpu_custom_call.1} parent=11 // pred_check
          %p479 = pneg %p309
        $region58: #{tpu_custom_call.1} parent=11 // pred_check_branch
          %481 = sbr.rel (%p479) target = $region60
        $region59: #{tpu_custom_call.1} parent=11 // pred_region
          %s483 = ssub.s32 16, 16
          %484 = vsyncadd [#allocation21], %s483
          %s486 = sshll.u32 [#allocation22], 4
          %s487 = int_to_ptr.vmem [resolvable:$true] %s486
          %489 = dma.hbm_to_vmem [thread:$0]  %s12, 16, %s487, [#allocation21]
        $region60: #{tpu_custom_call.1} parent=11 // pred_fallthru
          _
      $region12: #{tpu_custom_call.1} parent=5 // pred_fallthru
        _
      %p490 = scmp.lt.s32.totalorder %s31, 2
      // Predicated region
      $region61: #{tpu_custom_call.1} parent=5 // pred_check
        %p491 = pneg %p490
      $region62: #{tpu_custom_call.1} parent=5 // pred_check_branch
        %493 = sbr.rel (%p491) target = $region64
      $region63: #{tpu_custom_call.1} parent=5 // pred_region
        // Predicated region
        $region65: #{tpu_custom_call.1} parent=63 // pred_check
          %p494 = pneg %p51
        $region66: #{tpu_custom_call.1} parent=63 // pred_check_branch
          %496 = sbr.rel (%p494) target = $region68
        $region67: #{tpu_custom_call.1} parent=63 // pred_region
          %s497 = sand.u32 %s41, 1
          %s498 = scalar_lea.sflag [#allocation3], %s497
          %s499 = sand.u32 %s41, 1
          %s500 = smul.addr %s499, 16
          %s501 = scalar_lea.vmem [#allocation2], %s500
          %s503 = ssub.s32 256, 256
          %504 = vsyncadd %s498, %s503
          %s505 = smul.addr %s31, 2
          %s506 = smul.addr %s505, 128
          %s507 = scalar_lea.hbm %s0, %s506
          %s508 = sshll.u32 %s501, 4
          %s509 = int_to_ptr.vmem [resolvable:$true] %s508
          %514 = dma.hbm_to_vmem [thread:$0]  %s507, 256, %s509, %s498, 128, 128, 8
        $region68: #{tpu_custom_call.1} parent=63 // pred_fallthru
          _
      $region64: #{tpu_custom_call.1} parent=5 // pred_fallthru
        _
      %p515 = scmp.le.s32.totalorder 1, %s31
      %p516 = scmp.lt.s32.totalorder %s31, 3
      %p517 = pnand %p515, %p516
      %p518 = pneg %p517
      // Predicated region
      $region69: #{tpu_custom_call.1} parent=5 // pred_check
        _
      $region70: #{tpu_custom_call.1} parent=5 // pred_check_branch
        %520 = sbr.rel (%p517) target = $region72
      $region71: #{tpu_custom_call.1} parent=5 // pred_region
        %s521 = ssub.s32 %s31, 1
        %s522 = sand.u32 %s44, 1
        %s523 = scalar_lea.sflag [#allocation3], %s522
        %s524 = sand.u32 %s44, 1
        %s525 = smul.addr %s524, 16
        %s526 = scalar_lea.vmem [#allocation2], %s525
        // Predicated region
        $region73: #{tpu_custom_call.1} parent=71 // pred_check
          %p527 = pneg %p57
        $region74: #{tpu_custom_call.1} parent=71 // pred_check_branch
          %529 = sbr.rel (%p527) target = $region76
        $region75: #{tpu_custom_call.1} parent=71 // pred_region
          %530 = dma.done %s523, 256
        $region76: #{tpu_custom_call.1} parent=71 // pred_fallthru
          _
        // Predicated region
        $region77: #{tpu_custom_call.1} parent=71 // pred_check
          %p531 = pneg %p78
        $region78: #{tpu_custom_call.1} parent=71 // pred_check_branch
          %533 = sbr.rel (%p531) target = $region80
        $region79: #{tpu_custom_call.1} parent=71 // pred_region
          %534 = dma.done [#allocation6], 3072
        $region80: #{tpu_custom_call.1} parent=71 // pred_fallthru
          _
        // Predicated region
        $region81: #{tpu_custom_call.1} parent=71 // pred_check
          %p535 = pneg %p99
        $region82: #{tpu_custom_call.1} parent=71 // pred_check_branch
          %537 = sbr.rel (%p535) target = $region84
        $region83: #{tpu_custom_call.1} parent=71 // pred_region
          %538 = dma.done [#allocation6], 48
        $region84: #{tpu_custom_call.1} parent=71 // pred_fallthru
          _
        // Predicated region
        $region85: #{tpu_custom_call.1} parent=71 // pred_check
          %p539 = pneg %p120
        $region86: #{tpu_custom_call.1} parent=71 // pred_check_branch
          %541 = sbr.rel (%p539) target = $region88
        $region87: #{tpu_custom_call.1} parent=71 // pred_region
          %542 = dma.done [#allocation9], 1024
        $region88: #{tpu_custom_call.1} parent=71 // pred_fallthru
          _
        // Predicated region
        $region89: #{tpu_custom_call.1} parent=71 // pred_check
          %p543 = pneg %p141
        $region90: #{tpu_custom_call.1} parent=71 // pred_check_branch
          %545 = sbr.rel (%p543) target = $region92
        $region91: #{tpu_custom_call.1} parent=71 // pred_region
          %546 = dma.done [#allocation9], 16
        $region92: #{tpu_custom_call.1} parent=71 // pred_fallthru
          _
        // Predicated region
        $region93: #{tpu_custom_call.1} parent=71 // pred_check
          %p547 = pneg %p162
        $region94: #{tpu_custom_call.1} parent=71 // pred_check_branch
          %549 = sbr.rel (%p547) target = $region96
        $region95: #{tpu_custom_call.1} parent=71 // pred_region
          %550 = dma.done [#allocation12], 16
        $region96: #{tpu_custom_call.1} parent=71 // pred_fallthru
          _
        // Predicated region
        $region97: #{tpu_custom_call.1} parent=71 // pred_check
          %p551 = pneg %p183
        $region98: #{tpu_custom_call.1} parent=71 // pred_check_branch
          %553 = sbr.rel (%p551) target = $region100
        $region99: #{tpu_custom_call.1} parent=71 // pred_region
          %554 = dma.done [#allocation12], 16
        $region100: #{tpu_custom_call.1} parent=71 // pred_fallthru
          _
        // Predicated region
        $region101: #{tpu_custom_call.1} parent=71 // pred_check
          %p555 = pneg %p204
        $region102: #{tpu_custom_call.1} parent=71 // pred_check_branch
          %557 = sbr.rel (%p555) target = $region104
        $region103: #{tpu_custom_call.1} parent=71 // pred_region
          %558 = dma.done [#allocation15], 2048
        $region104: #{tpu_custom_call.1} parent=71 // pred_fallthru
          _
        // Predicated region
        $region105: #{tpu_custom_call.1} parent=71 // pred_check
          %p559 = pneg %p225
        $region106: #{tpu_custom_call.1} parent=71 // pred_check_branch
          %561 = sbr.rel (%p559) target = $region108
        $region107: #{tpu_custom_call.1} parent=71 // pred_region
          %562 = dma.done [#allocation15], 32
        $region108: #{tpu_custom_call.1} parent=71 // pred_fallthru
          _
        // Predicated region
        $region109: #{tpu_custom_call.1} parent=71 // pred_check
          %p563 = pneg %p246
        $region110: #{tpu_custom_call.1} parent=71 // pred_check_branch
          %565 = sbr.rel (%p563) target = $region112
        $region111: #{tpu_custom_call.1} parent=71 // pred_region
          %566 = dma.done [#allocation18], 2048
        $region112: #{tpu_custom_call.1} parent=71 // pred_fallthru
          _
        // Predicated region
        $region113: #{tpu_custom_call.1} parent=71 // pred_check
          %p567 = pneg %p267
        $region114: #{tpu_custom_call.1} parent=71 // pred_check_branch
          %569 = sbr.rel (%p567) target = $region116
        $region115: #{tpu_custom_call.1} parent=71 // pred_region
          %570 = dma.done [#allocation18], 16
        $region116: #{tpu_custom_call.1} parent=71 // pred_fallthru
          _
        // Predicated region
        $region117: #{tpu_custom_call.1} parent=71 // pred_check
          %p571 = pneg %p288
        $region118: #{tpu_custom_call.1} parent=71 // pred_check_branch
          %573 = sbr.rel (%p571) target = $region120
        $region119: #{tpu_custom_call.1} parent=71 // pred_region
          %574 = dma.done [#allocation21], 16
        $region120: #{tpu_custom_call.1} parent=71 // pred_fallthru
          _
        // Predicated region
        $region121: #{tpu_custom_call.1} parent=71 // pred_check
          %p575 = pneg %p309
        $region122: #{tpu_custom_call.1} parent=71 // pred_check_branch
          %577 = sbr.rel (%p575) target = $region124
        $region123: #{tpu_custom_call.1} parent=71 // pred_region
          %578 = dma.done [#allocation21], 16
        $region124: #{tpu_custom_call.1} parent=71 // pred_fallthru
          _
        %s579 = sand.u32 %s44, 1
        %s580 = scalar_lea.sflag [#allocation3], %s579
        %s581 = sand.u32 %s44, 1
        %s582 = smul.addr %s581, 16
        %s583 = scalar_lea.vmem [#allocation2], %s582
        %p584 = pneg %p57
        %p585 = pneg %p54
        %p586 = pneg %p78
        %p587 = pneg %p75
        %p588 = pneg %p99
        %p589 = pneg %p96
        %p590 = pneg %p120
        %p591 = pneg %p117
        %p592 = pneg %p141
        %p593 = pneg %p138
        %p594 = pneg %p162
        %p595 = pneg %p159
        %p596 = pneg %p183
        %p597 = pneg %p180
        %p598 = pneg %p204
        %p599 = pneg %p201
        %p600 = pneg %p225
        %p601 = pneg %p222
        %p602 = pneg %p246
        %p603 = pneg %p243
        %p604 = pneg %p267
        %p605 = pneg %p264
        %p606 = pneg %p288
        %p607 = pneg %p285
        %p608 = pneg %p309
        %p609 = pneg %p306
        %p610 = pneg %p335
        %p611 = pneg %p332
        %s612 = sand.u32 %s322, 1
        %s613 = scalar_lea.sflag [#allocation4], %s612
        %s614 = sand.u32 %s322, 1
        %s615 = smul.addr %s614, 16
        %s616 = scalar_lea.vmem [#allocation23], %s615
        %v618 = vld [vmem:[%s526] sm:$0xff]
        %v619 = vld [vmem:[%s526 + $0x8] sm:$0xff]
        %v620 = vpack.c.bf16 %v619, %v618
        %v621 = vld [vmem:[#allocation5] sm:$0xff]
        %v622 = vld [vmem:[#allocation5 + $0x8] sm:$0xf]
        %v623 = vld [vmem:[#allocation5 + $0xc] sm:$0xff]
        %v624 = vld [vmem:[#allocation5 + $0x14] sm:$0xf]
        %v625 = vld [vmem:[#allocation5 + $0x18] sm:$0xff]
        %v626 = vld [vmem:[#allocation5 + $0x20] sm:$0xf]
        %v627 = vld [vmem:[#allocation5 + $0x24] sm:$0xff]
        %v628 = vld [vmem:[#allocation5 + $0x2c] sm:$0xf]
        %v629 = vld [vmem:[#allocation5 + $0x30] sm:$0xff]
        %v630 = vld [vmem:[#allocation5 + $0x38] sm:$0xf]
        %v631 = vld [vmem:[#allocation5 + $0x3c] sm:$0xff]
        %v632 = vld [vmem:[#allocation5 + $0x44] sm:$0xf]
        %v633 = vld [vmem:[#allocation5 + $0x48] sm:$0xff]
        %v634 = vld [vmem:[#allocation5 + $0x50] sm:$0xf]
        %v635 = vld [vmem:[#allocation5 + $0x54] sm:$0xff]
        %v636 = vld [vmem:[#allocation5 + $0x5c] sm:$0xf]
        %v637 = vld [vmem:[#allocation5 + $0x60] sm:$0xff]
        %v638 = vld [vmem:[#allocation5 + $0x68] sm:$0xf]
        %v639 = vld [vmem:[#allocation5 + $0x6c] sm:$0xff]
        %v640 = vld [vmem:[#allocation5 + $0x74] sm:$0xf]
        %v641 = vld [vmem:[#allocation5 + $0x78] sm:$0xff]
        %v642 = vld [vmem:[#allocation5 + $0x80] sm:$0xf]
        %v643 = vld [vmem:[#allocation5 + $0x84] sm:$0xff]
        %v644 = vld [vmem:[#allocation5 + $0x8c] sm:$0xf]
        %v645 = vld [vmem:[#allocation5 + $0x90] sm:$0xff]
        %v646 = vld [vmem:[#allocation5 + $0x98] sm:$0xf]
        %v647 = vld [vmem:[#allocation5 + $0x9c] sm:$0xff]
        %v648 = vld [vmem:[#allocation5 + $0xa4] sm:$0xf]
        %v649 = vld [vmem:[#allocation5 + $0xa8] sm:$0xff]
        %v650 = vld [vmem:[#allocation5 + $0xb0] sm:$0xf]
        %v651 = vld [vmem:[#allocation5 + $0xb4] sm:$0xff]
        %v652 = vld [vmem:[#allocation5 + $0xbc] sm:$0xf]
        %v653 = vld [vmem:[#allocation7] sm:$0x7]
        %v655 = vlaneseq
        %v656 = vshrl.u32 %v655, 7
        %v657 = vsub.s32 0, %v656
        %v658 = vrot.slane %v653, %v657
        %v659 = vlaneseq
        %v660 = vshrl.u32 %v659, 7
        %v661 = vsub.s32 1, %v660
        %v662 = vrot.slane %v653, %v661
        %v663 = vlaneseq
        %v664 = vshrl.u32 %v663, 7
        %v665 = vsub.s32 2, %v664
        %v666 = vrot.slane %v653, %v665
        %v702 = vunpack.c.l.b16 %v621
        %v703 = vunpack.c.h.b16 %v621
        %v704 = vunpack.c.l.b16 %v622
        %v705 = vunpack.c.l.b16 %v623
        %v706 = vunpack.c.h.b16 %v623
        %v707 = vunpack.c.l.b16 %v624
        %v708 = vunpack.c.l.b16 %v625
        %v709 = vunpack.c.h.b16 %v625
        %v710 = vunpack.c.l.b16 %v626
        %v711 = vunpack.c.l.b16 %v627
        %v712 = vunpack.c.h.b16 %v627
        %v713 = vunpack.c.l.b16 %v628
        %v714 = vunpack.c.l.b16 %v629
        %v715 = vunpack.c.h.b16 %v629
        %v716 = vunpack.c.l.b16 %v630
        %v717 = vunpack.c.l.b16 %v631
        %v718 = vunpack.c.h.b16 %v631
        %v719 = vunpack.c.l.b16 %v632
        %v720 = vunpack.c.l.b16 %v633
        %v721 = vunpack.c.h.b16 %v633
        %v722 = vunpack.c.l.b16 %v634
        %v723 = vunpack.c.l.b16 %v635
        %v724 = vunpack.c.h.b16 %v635
        %v725 = vunpack.c.l.b16 %v636
        %v726 = vunpack.c.l.b16 %v637
        %v727 = vunpack.c.h.b16 %v637
        %v728 = vunpack.c.l.b16 %v638
        %v729 = vunpack.c.l.b16 %v639
        %v730 = vunpack.c.h.b16 %v639
        %v731 = vunpack.c.l.b16 %v640
        %v732 = vunpack.c.l.b16 %v641
        %v733 = vunpack.c.h.b16 %v641
        %v734 = vunpack.c.l.b16 %v642
        %v735 = vunpack.c.l.b16 %v643
        %v736 = vunpack.c.h.b16 %v643
        %v737 = vunpack.c.l.b16 %v644
        %v738 = vunpack.c.l.b16 %v645
        %v739 = vunpack.c.h.b16 %v645
        %v740 = vunpack.c.l.b16 %v646
        %v741 = vunpack.c.l.b16 %v647
        %v742 = vunpack.c.h.b16 %v647
        %v743 = vunpack.c.l.b16 %v648
        %v744 = vunpack.c.l.b16 %v649
        %v745 = vunpack.c.h.b16 %v649
        %v746 = vunpack.c.l.b16 %v650
        %v747 = vunpack.c.l.b16 %v651
        %v748 = vunpack.c.h.b16 %v651
        %v749 = vunpack.c.l.b16 %v652
        %v750 = vpack.c.b16 %v705, %v702
        %v751 = vpack.c.b16 %v706, %v703
        %v752 = vpack.c.b16 %v707, %v704
        %v753 = vpack.c.b16 %v711, %v708
        %v754 = vpack.c.b16 %v712, %v709
        %v755 = vpack.c.b16 %v713, %v710
        %v756 = vpack.c.b16 %v717, %v714
        %v757 = vpack.c.b16 %v718, %v715
        %v758 = vpack.c.b16 %v719, %v716
        %v759 = vpack.c.b16 %v723, %v720
        %v760 = vpack.c.b16 %v724, %v721
        %v761 = vpack.c.b16 %v725, %v722
        %v762 = vpack.c.b16 %v729, %v726
        %v763 = vpack.c.b16 %v730, %v727
        %v764 = vpack.c.b16 %v731, %v728
        %v765 = vpack.c.b16 %v735, %v732
        %v766 = vpack.c.b16 %v736, %v733
        %v767 = vpack.c.b16 %v737, %v734
        %v768 = vpack.c.b16 %v741, %v738
        %v769 = vpack.c.b16 %v742, %v739
        %v770 = vpack.c.b16 %v743, %v740
        %v771 = vpack.c.b16 %v747, %v744
        %v772 = vpack.c.b16 %v748, %v745
        %v773 = vpack.c.b16 %v749, %v746
        %798 = vmatprep.subr.bf16.mxu0 %v751
        %799 = vmatpush1.bf16.msra.mxu0 %v750
        %800 = vmatprep.subr.bf16.mxu0 %v754
        %801 = vmatpush1.bf16.msra.mxu0 %v753
        %802 = vmatprep.subr.bf16.mxu0 %v757
        %803 = vmatpush1.bf16.msra.mxu0 %v756
        %804 = vmatprep.subr.bf16.mxu0 %v760
        %805 = vmatpush1.bf16.msra.mxu0 %v759
        %806 = vmatprep.subr.bf16.mxu0 %v763
        %807 = vmatpush1.bf16.msra.mxu0 %v762
        %808 = vmatprep.subr.bf16.mxu0 %v766
        %809 = vmatpush1.bf16.msra.mxu0 %v765
        %810 = vmatprep.subr.bf16.mxu0 %v769
        %811 = vmatpush1.bf16.msra.mxu0 %v768
        %812 = vmatprep.subr.bf16.mxu0 %v772
        %813 = vmatpush1.bf16.msra.mxu0 %v771
        %814 = vmatprep.subr.bf16.mxu0 0
        %815 = vmatpush1.bf16.msra.mxu0 0
        %816 = vmatprep.subr.bf16.mxu0 0
        %817 = vmatpush1.bf16.msra.mxu0 0
        %818 = vmatprep.subr.bf16.mxu0 0
        %819 = vmatpush1.bf16.msra.mxu0 0
        %820 = vmatprep.subr.bf16.mxu0 0
        %821 = vmatpush1.bf16.msra.mxu0 0
        %822 = vmatprep.subr.bf16.mxu0 0
        %823 = vmatpush1.bf16.msra.mxu0 0
        %824 = vmatprep.subr.bf16.mxu0 0
        %825 = vmatpush1.bf16.msra.mxu0 0
        %826 = vmatprep.subr.bf16.mxu0 0
        %827 = vmatpush1.bf16.msra.mxu0 0
        %828 = vmatprep.subr.bf16.mxu0 0
        %829 = vmatpush1.bf16.msra.mxu0 0
        %830 = vmatprep.mubr.bf16.mxu0 0
        %831 = vmatmul.mubr.bf16.gmra.mrb[0].mxu0 %v620
        %v832 = vpop.f32.mrb[0].mxu0
        %v833 = vadd.f32 %v658, %v832
        %v834 = vpop.f32.mrb[0].mxu0
        %v835 = vadd.f32 %v662, %v834
        %v836 = vpop.f32.mrb[0].mxu0
        %v837 = vadd.f32 %v658, %v836
        %v838 = vpop.f32.mrb[0].mxu0
        %v839 = vadd.f32 %v662, %v838
        %840 = vdwg.mxu0
        %841 = vmatprep.subr.bf16.mxu0 0
        %842 = vmatpush1.bf16.msra.mxu0 %v752
        %843 = vmatprep.subr.bf16.mxu0 0
        %844 = vmatpush1.bf16.msra.mxu0 %v755
        %845 = vmatprep.subr.bf16.mxu0 0
        %846 = vmatpush1.bf16.msra.mxu0 %v758
        %847 = vmatprep.subr.bf16.mxu0 0
        %848 = vmatpush1.bf16.msra.mxu0 %v761
        %849 = vmatprep.subr.bf16.mxu0 0
        %850 = vmatpush1.bf16.msra.mxu0 %v764
        %851 = vmatprep.subr.bf16.mxu0 0
        %852 = vmatpush1.bf16.msra.mxu0 %v767
        %853 = vmatprep.subr.bf16.mxu0 0
        %854 = vmatpush1.bf16.msra.mxu0 %v770
        %855 = vmatprep.subr.bf16.mxu0 0
        %856 = vmatpush1.bf16.msra.mxu0 %v773
        %857 = vmatprep.subr.bf16.mxu0 0
        %858 = vmatpush1.bf16.msra.mxu0 0
        %859 = vmatprep.subr.bf16.mxu0 0
        %860 = vmatpush1.bf16.msra.mxu0 0
        %861 = vmatprep.subr.bf16.mxu0 0
        %862 = vmatpush1.bf16.msra.mxu0 0
        %863 = vmatprep.subr.bf16.mxu0 0
        %864 = vmatpush1.bf16.msra.mxu0 0
        %865 = vmatprep.subr.bf16.mxu0 0
        %866 = vmatpush1.bf16.msra.mxu0 0
        %867 = vmatprep.subr.bf16.mxu0 0
        %868 = vmatpush1.bf16.msra.mxu0 0
        %869 = vmatprep.subr.bf16.mxu0 0
        %870 = vmatpush1.bf16.msra.mxu0 0
        %871 = vmatprep.subr.bf16.mxu0 0
        %872 = vmatpush1.bf16.msra.mxu0 0
        %873 = vmatprep.mubr.bf16.mxu0 0
        %874 = vmatmul.mubr.bf16.gmra.mrb[0].mxu0 %v620
        %v875 = vpop.f32.mrb[0].mxu0
        %v876 = vadd.f32 %v666, %v875
        %v877 = vpop.f32.mrb[0].mxu0
        %v878 = vpop.f32.mrb[0].mxu0
        %v879 = vadd.f32 %v666, %v878
        %v880 = vpop.f32.mrb[0].mxu0
        %881 = vdwg.mxu0
        %v882 = vmul.f32 %v833, 0.17677669
        %v883 = vmul.f32 %v837, 0.17677669
        %886 = vrot.lane.b32.xlu0 %v882, 96
        %v887 = vpop.permute.xlu0 %886
        %888 = vrot.lane.b32.xlu0 %v883, 96
        %v889 = vpop.permute.xlu0 %888
        %892 = vrot.lane.b32.xlu0 %v882, 64
        %v893 = vpop.permute.xlu0 %892
        %894 = vrot.lane.b32.xlu0 %v883, 64
        %v895 = vpop.permute.xlu0 %894
        %898 = vrot.lane.b32.xlu0 %v882, 32
        %v899 = vpop.permute.xlu0 %898
        %900 = vrot.lane.b32.xlu0 %v883, 32
        %v901 = vpop.permute.xlu0 %900
        %v904 = vcombine.low %v882, %v893
        %v905 = vcombine.high %v882, %v893
        %v907 = vunpack.c.l.s4 1983009808
        %v908 = vunpack.c.0.s8 %v907
        %v909 = vlaneseq
        %v910 = vshrl.u32 %v909, 7
        %v911 = vsub.s32 %v908, %v910
        %v912 = vrot.slane %v904, %v911
        %v914 = vunpack.c.l.s4 1983009808
        %v915 = vunpack.c.0.s8 %v914
        %v916 = vlaneseq
        %v917 = vshrl.u32 %v916, 7
        %v918 = vsub.s32 %v915, %v917
        %v919 = vrot.slane %v905, %v918
        %v920 = vcombine.low %v887, %v899
        %v921 = vcombine.high %v887, %v899
        %v923 = vunpack.c.l.s4 1983009808
        %v924 = vunpack.c.0.s8 %v923
        %v925 = vlaneseq
        %v926 = vshrl.u32 %v925, 7
        %v927 = vsub.s32 %v924, %v926
        %v928 = vrot.slane %v920, %v927
        %v930 = vunpack.c.l.s4 1983009808
        %v931 = vunpack.c.0.s8 %v930
        %v932 = vlaneseq
        %v933 = vshrl.u32 %v932, 7
        %v934 = vsub.s32 %v931, %v933
        %v935 = vrot.slane %v921, %v934
        %v936 = vcombine.low %v912, %v928
        %v937 = vcombine.high %v912, %v928
        %v939 = vunpack.c.l.s4 1934713408
        %v940 = vunpack.c.0.s8 %v939
        %v941 = vlaneseq
        %v942 = vshrl.u32 %v941, 7
        %v943 = vsub.s32 %v940, %v942
        %v944 = vrot.slane %v936, %v943
        %v946 = vunpack.c.l.s4 1934713408
        %v947 = vunpack.c.0.s8 %v946
        %v948 = vlaneseq
        %v949 = vshrl.u32 %v948, 7
        %v950 = vsub.s32 %v947, %v949
        %v951 = vrot.slane %v937, %v950
        %v952 = vcombine.low %v919, %v935
        %v953 = vcombine.high %v919, %v935
        %v955 = vunpack.c.l.s4 1934713408
        %v956 = vunpack.c.0.s8 %v955
        %v957 = vlaneseq
        %v958 = vshrl.u32 %v957, 7
        %v959 = vsub.s32 %v956, %v958
        %v960 = vrot.slane %v952, %v959
        %v962 = vunpack.c.l.s4 1934713408
        %v963 = vunpack.c.0.s8 %v962
        %v964 = vlaneseq
        %v965 = vshrl.u32 %v964, 7
        %v966 = vsub.s32 %v963, %v965
        %v967 = vrot.slane %v953, %v966
        %v968 = vcombine.high %v944, 0.0
        %v969 = vcombine.high %v951, 0.0
        %v970 = vcombine.high %v960, 0.0
        %v971 = vcombine.high %v967, 0.0
        %v972 = vcombine.low %v883, %v895
        %v973 = vcombine.high %v883, %v895
        %v975 = vunpack.c.l.s4 1983009808
        %v976 = vunpack.c.0.s8 %v975
        %v977 = vlaneseq
        %v978 = vshrl.u32 %v977, 7
        %v979 = vsub.s32 %v976, %v978
        %v980 = vrot.slane %v972, %v979
        %v982 = vunpack.c.l.s4 1983009808
        %v983 = vunpack.c.0.s8 %v982
        %v984 = vlaneseq
        %v985 = vshrl.u32 %v984, 7
        %v986 = vsub.s32 %v983, %v985
        %v987 = vrot.slane %v973, %v986
        %v988 = vcombine.low %v889, %v901
        %v989 = vcombine.high %v889, %v901
        %v991 = vunpack.c.l.s4 1983009808
        %v992 = vunpack.c.0.s8 %v991
        %v993 = vlaneseq
        %v994 = vshrl.u32 %v993, 7
        %v995 = vsub.s32 %v992, %v994
        %v996 = vrot.slane %v988, %v995
        %v998 = vunpack.c.l.s4 1983009808
        %v999 = vunpack.c.0.s8 %v998
        %v1000 = vlaneseq
        %v1001 = vshrl.u32 %v1000, 7
        %v1002 = vsub.s32 %v999, %v1001
        %v1003 = vrot.slane %v989, %v1002
        %v1004 = vcombine.low %v980, %v996
        %v1005 = vcombine.high %v980, %v996
        %v1007 = vunpack.c.l.s4 1934713408
        %v1008 = vunpack.c.0.s8 %v1007
        %v1009 = vlaneseq
        %v1010 = vshrl.u32 %v1009, 7
        %v1011 = vsub.s32 %v1008, %v1010
        %v1012 = vrot.slane %v1004, %v1011
        %v1014 = vunpack.c.l.s4 1934713408
        %v1015 = vunpack.c.0.s8 %v1014
        %v1016 = vlaneseq
        %v1017 = vshrl.u32 %v1016, 7
        %v1018 = vsub.s32 %v1015, %v1017
        %v1019 = vrot.slane %v1005, %v1018
        %v1020 = vcombine.low %v987, %v1003
        %v1021 = vcombine.high %v987, %v1003
        %v1023 = vunpack.c.l.s4 1934713408
        %v1024 = vunpack.c.0.s8 %v1023
        %v1025 = vlaneseq
        %v1026 = vshrl.u32 %v1025, 7
        %v1027 = vsub.s32 %v1024, %v1026
        %v1028 = vrot.slane %v1020, %v1027
        %v1030 = vunpack.c.l.s4 1934713408
        %v1031 = vunpack.c.0.s8 %v1030
        %v1032 = vlaneseq
        %v1033 = vshrl.u32 %v1032, 7
        %v1034 = vsub.s32 %v1031, %v1033
        %v1035 = vrot.slane %v1021, %v1034
        %v1036 = vcombine.high %v1012, 0.0
        %v1037 = vcombine.high %v1019, 0.0
        %v1038 = vcombine.high %v1028, 0.0
        %v1039 = vcombine.high %v1035, 0.0
        %v1040 = vcombine.low %v944, %v951
        %v1042 = vunpack.c.l.s4 1983009808
        %v1043 = vunpack.c.0.s8 %v1042
        %v1044 = vlaneseq
        %v1045 = vshrl.u32 %v1044, 7
        %v1046 = vsub.s32 %v1043, %v1045
        %v1047 = vrot.slane %v1040, %v1046
        %v1048 = vcombine.low %v968, %v969
        %v1050 = vunpack.c.l.s4 1983009808
        %v1051 = vunpack.c.0.s8 %v1050
        %v1052 = vlaneseq
        %v1053 = vshrl.u32 %v1052, 7
        %v1054 = vsub.s32 %v1051, %v1053
        %v1055 = vrot.slane %v1048, %v1054
        %v1056 = vcombine.low %v960, %v967
        %v1058 = vunpack.c.l.s4 1983009808
        %v1059 = vunpack.c.0.s8 %v1058
        %v1060 = vlaneseq
        %v1061 = vshrl.u32 %v1060, 7
        %v1062 = vsub.s32 %v1059, %v1061
        %v1063 = vrot.slane %v1056, %v1062
        %v1064 = vcombine.low %v970, %v971
        %v1066 = vunpack.c.l.s4 1983009808
        %v1067 = vunpack.c.0.s8 %v1066
        %v1068 = vlaneseq
        %v1069 = vshrl.u32 %v1068, 7
        %v1070 = vsub.s32 %v1067, %v1069
        %v1071 = vrot.slane %v1064, %v1070
        %v1072 = vcombine.low %v1047, %v1055
        %v1073 = vcombine.high %v1047, %v1055
        %v1075 = vunpack.c.l.s4 1934713408
        %v1076 = vunpack.c.0.s8 %v1075
        %v1077 = vlaneseq
        %v1078 = vshrl.u32 %v1077, 7
        %v1079 = vsub.s32 %v1076, %v1078
        %v1080 = vrot.slane %v1072, %v1079
        %v1082 = vunpack.c.l.s4 1934713408
        %v1083 = vunpack.c.0.s8 %v1082
        %v1084 = vlaneseq
        %v1085 = vshrl.u32 %v1084, 7
        %v1086 = vsub.s32 %v1083, %v1085
        %v1087 = vrot.slane %v1073, %v1086
        %v1088 = vcombine.low %v1063, %v1071
        %v1089 = vcombine.high %v1063, %v1071
        %v1091 = vunpack.c.l.s4 1934713408
        %v1092 = vunpack.c.0.s8 %v1091
        %v1093 = vlaneseq
        %v1094 = vshrl.u32 %v1093, 7
        %v1095 = vsub.s32 %v1092, %v1094
        %v1096 = vrot.slane %v1088, %v1095
        %v1098 = vunpack.c.l.s4 1934713408
        %v1099 = vunpack.c.0.s8 %v1098
        %v1100 = vlaneseq
        %v1101 = vshrl.u32 %v1100, 7
        %v1102 = vsub.s32 %v1099, %v1101
        %v1103 = vrot.slane %v1089, %v1102
        %v1104 = vcombine.low %v1080, %v1096
        %v1105 = vcombine.high %v1080, %v1096
        %v1106 = vcombine.low %v1087, %v1103
        %v1107 = vcombine.high %v1087, %v1103
        %v1108 = vcombine.low %v1012, %v1019
        %v1110 = vunpack.c.l.s4 1983009808
        %v1111 = vunpack.c.0.s8 %v1110
        %v1112 = vlaneseq
        %v1113 = vshrl.u32 %v1112, 7
        %v1114 = vsub.s32 %v1111, %v1113
        %v1115 = vrot.slane %v1108, %v1114
        %v1116 = vcombine.low %v1036, %v1037
        %v1118 = vunpack.c.l.s4 1983009808
        %v1119 = vunpack.c.0.s8 %v1118
        %v1120 = vlaneseq
        %v1121 = vshrl.u32 %v1120, 7
        %v1122 = vsub.s32 %v1119, %v1121
        %v1123 = vrot.slane %v1116, %v1122
        %v1124 = vcombine.low %v1028, %v1035
        %v1126 = vunpack.c.l.s4 1983009808
        %v1127 = vunpack.c.0.s8 %v1126
        %v1128 = vlaneseq
        %v1129 = vshrl.u32 %v1128, 7
        %v1130 = vsub.s32 %v1127, %v1129
        %v1131 = vrot.slane %v1124, %v1130
        %v1132 = vcombine.low %v1038, %v1039
        %v1134 = vunpack.c.l.s4 1983009808
        %v1135 = vunpack.c.0.s8 %v1134
        %v1136 = vlaneseq
        %v1137 = vshrl.u32 %v1136, 7
        %v1138 = vsub.s32 %v1135, %v1137
        %v1139 = vrot.slane %v1132, %v1138
        %v1140 = vcombine.low %v1115, %v1123
        %v1141 = vcombine.high %v1115, %v1123
        %v1143 = vunpack.c.l.s4 1934713408
        %v1144 = vunpack.c.0.s8 %v1143
        %v1145 = vlaneseq
        %v1146 = vshrl.u32 %v1145, 7
        %v1147 = vsub.s32 %v1144, %v1146
        %v1148 = vrot.slane %v1140, %v1147
        %v1150 = vunpack.c.l.s4 1934713408
        %v1151 = vunpack.c.0.s8 %v1150
        %v1152 = vlaneseq
        %v1153 = vshrl.u32 %v1152, 7
        %v1154 = vsub.s32 %v1151, %v1153
        %v1155 = vrot.slane %v1141, %v1154
        %v1156 = vcombine.low %v1131, %v1139
        %v1157 = vcombine.high %v1131, %v1139
        %v1159 = vunpack.c.l.s4 1934713408
        %v1160 = vunpack.c.0.s8 %v1159
        %v1161 = vlaneseq
        %v1162 = vshrl.u32 %v1161, 7
        %v1163 = vsub.s32 %v1160, %v1162
        %v1164 = vrot.slane %v1156, %v1163
        %v1166 = vunpack.c.l.s4 1934713408
        %v1167 = vunpack.c.0.s8 %v1166
        %v1168 = vlaneseq
        %v1169 = vshrl.u32 %v1168, 7
        %v1170 = vsub.s32 %v1167, %v1169
        %v1171 = vrot.slane %v1157, %v1170
        %v1172 = vcombine.low %v1148, %v1164
        %v1173 = vcombine.high %v1148, %v1164
        %v1174 = vcombine.low %v1155, %v1171
        %v1175 = vcombine.high %v1155, %v1171
        %v1176 = vpack.c.bf16 %v1172, %v1104
        %v1177 = vpack.c.bf16 %v1173, %v1105
        %v1178 = vpack.c.bf16 %v1174, %v1106
        %v1179 = vpack.c.bf16 %v1175, %v1107
        %1182 = vrot.lane.b32.xlu0 %v835, 96
        %v1183 = vpop.permute.xlu0 %1182
        %1184 = vrot.lane.b32.xlu0 %v839, 96
        %v1185 = vpop.permute.xlu0 %1184
        %1188 = vrot.lane.b32.xlu0 %v835, 64
        %v1189 = vpop.permute.xlu0 %1188
        %1190 = vrot.lane.b32.xlu0 %v839, 64
        %v1191 = vpop.permute.xlu0 %1190
        %1194 = vrot.lane.b32.xlu0 %v835, 32
        %v1195 = vpop.permute.xlu0 %1194
        %1196 = vrot.lane.b32.xlu0 %v839, 32
        %v1197 = vpop.permute.xlu0 %1196
        %v1200 = vcombine.low %v835, %v1189
        %v1201 = vcombine.high %v835, %v1189
        %v1203 = vunpack.c.l.s4 1983009808
        %v1204 = vunpack.c.0.s8 %v1203
        %v1205 = vlaneseq
        %v1206 = vshrl.u32 %v1205, 7
        %v1207 = vsub.s32 %v1204, %v1206
        %v1208 = vrot.slane %v1200, %v1207
        %v1210 = vunpack.c.l.s4 1983009808
        %v1211 = vunpack.c.0.s8 %v1210
        %v1212 = vlaneseq
        %v1213 = vshrl.u32 %v1212, 7
        %v1214 = vsub.s32 %v1211, %v1213
        %v1215 = vrot.slane %v1201, %v1214
        %v1216 = vcombine.low %v1183, %v1195
        %v1217 = vcombine.high %v1183, %v1195
        %v1219 = vunpack.c.l.s4 1983009808
        %v1220 = vunpack.c.0.s8 %v1219
        %v1221 = vlaneseq
        %v1222 = vshrl.u32 %v1221, 7
        %v1223 = vsub.s32 %v1220, %v1222
        %v1224 = vrot.slane %v1216, %v1223
        %v1226 = vunpack.c.l.s4 1983009808
        %v1227 = vunpack.c.0.s8 %v1226
        %v1228 = vlaneseq
        %v1229 = vshrl.u32 %v1228, 7
        %v1230 = vsub.s32 %v1227, %v1229
        %v1231 = vrot.slane %v1217, %v1230
        %v1232 = vcombine.low %v1208, %v1224
        %v1233 = vcombine.high %v1208, %v1224
        %v1235 = vunpack.c.l.s4 1934713408
        %v1236 = vunpack.c.0.s8 %v1235
        %v1237 = vlaneseq
        %v1238 = vshrl.u32 %v1237, 7
        %v1239 = vsub.s32 %v1236, %v1238
        %v1240 = vrot.slane %v1232, %v1239
        %v1242 = vunpack.c.l.s4 1934713408
        %v1243 = vunpack.c.0.s8 %v1242
        %v1244 = vlaneseq
        %v1245 = vshrl.u32 %v1244, 7
        %v1246 = vsub.s32 %v1243, %v1245
        %v1247 = vrot.slane %v1233, %v1246
        %v1248 = vcombine.low %v1215, %v1231
        %v1249 = vcombine.high %v1215, %v1231
        %v1251 = vunpack.c.l.s4 1934713408
        %v1252 = vunpack.c.0.s8 %v1251
        %v1253 = vlaneseq
        %v1254 = vshrl.u32 %v1253, 7
        %v1255 = vsub.s32 %v1252, %v1254
        %v1256 = vrot.slane %v1248, %v1255
        %v1258 = vunpack.c.l.s4 1934713408
        %v1259 = vunpack.c.0.s8 %v1258
        %v1260 = vlaneseq
        %v1261 = vshrl.u32 %v1260, 7
        %v1262 = vsub.s32 %v1259, %v1261
        %v1263 = vrot.slane %v1249, %v1262
        %v1264 = vcombine.high %v1240, 0.0
        %v1265 = vcombine.high %v1247, 0.0
        %v1266 = vcombine.high %v1256, 0.0
        %v1267 = vcombine.high %v1263, 0.0
        %v1268 = vcombine.low %v839, %v1191
        %v1269 = vcombine.high %v839, %v1191
        %v1271 = vunpack.c.l.s4 1983009808
        %v1272 = vunpack.c.0.s8 %v1271
        %v1273 = vlaneseq
        %v1274 = vshrl.u32 %v1273, 7
        %v1275 = vsub.s32 %v1272, %v1274
        %v1276 = vrot.slane %v1268, %v1275
        %v1278 = vunpack.c.l.s4 1983009808
        %v1279 = vunpack.c.0.s8 %v1278
        %v1280 = vlaneseq
        %v1281 = vshrl.u32 %v1280, 7
        %v1282 = vsub.s32 %v1279, %v1281
        %v1283 = vrot.slane %v1269, %v1282
        %v1284 = vcombine.low %v1185, %v1197
        %v1285 = vcombine.high %v1185, %v1197
        %v1287 = vunpack.c.l.s4 1983009808
        %v1288 = vunpack.c.0.s8 %v1287
        %v1289 = vlaneseq
        %v1290 = vshrl.u32 %v1289, 7
        %v1291 = vsub.s32 %v1288, %v1290
        %v1292 = vrot.slane %v1284, %v1291
        %v1294 = vunpack.c.l.s4 1983009808
        %v1295 = vunpack.c.0.s8 %v1294
        %v1296 = vlaneseq
        %v1297 = vshrl.u32 %v1296, 7
        %v1298 = vsub.s32 %v1295, %v1297
        %v1299 = vrot.slane %v1285, %v1298
        %v1300 = vcombine.low %v1276, %v1292
        %v1301 = vcombine.high %v1276, %v1292
        %v1303 = vunpack.c.l.s4 1934713408
        %v1304 = vunpack.c.0.s8 %v1303
        %v1305 = vlaneseq
        %v1306 = vshrl.u32 %v1305, 7
        %v1307 = vsub.s32 %v1304, %v1306
        %v1308 = vrot.slane %v1300, %v1307
        %v1310 = vunpack.c.l.s4 1934713408
        %v1311 = vunpack.c.0.s8 %v1310
        %v1312 = vlaneseq
        %v1313 = vshrl.u32 %v1312, 7
        %v1314 = vsub.s32 %v1311, %v1313
        %v1315 = vrot.slane %v1301, %v1314
        %v1316 = vcombine.low %v1283, %v1299
        %v1317 = vcombine.high %v1283, %v1299
        %v1319 = vunpack.c.l.s4 1934713408
        %v1320 = vunpack.c.0.s8 %v1319
        %v1321 = vlaneseq
        %v1322 = vshrl.u32 %v1321, 7
        %v1323 = vsub.s32 %v1320, %v1322
        %v1324 = vrot.slane %v1316, %v1323
        %v1326 = vunpack.c.l.s4 1934713408
        %v1327 = vunpack.c.0.s8 %v1326
        %v1328 = vlaneseq
        %v1329 = vshrl.u32 %v1328, 7
        %v1330 = vsub.s32 %v1327, %v1329
        %v1331 = vrot.slane %v1317, %v1330
        %v1332 = vcombine.high %v1308, 0.0
        %v1333 = vcombine.high %v1315, 0.0
        %v1334 = vcombine.high %v1324, 0.0
        %v1335 = vcombine.high %v1331, 0.0
        %v1336 = vcombine.low %v1240, %v1247
        %v1338 = vunpack.c.l.s4 1983009808
        %v1339 = vunpack.c.0.s8 %v1338
        %v1340 = vlaneseq
        %v1341 = vshrl.u32 %v1340, 7
        %v1342 = vsub.s32 %v1339, %v1341
        %v1343 = vrot.slane %v1336, %v1342
        %v1344 = vcombine.low %v1264, %v1265
        %v1346 = vunpack.c.l.s4 1983009808
        %v1347 = vunpack.c.0.s8 %v1346
        %v1348 = vlaneseq
        %v1349 = vshrl.u32 %v1348, 7
        %v1350 = vsub.s32 %v1347, %v1349
        %v1351 = vrot.slane %v1344, %v1350
        %v1352 = vcombine.low %v1256, %v1263
        %v1354 = vunpack.c.l.s4 1983009808
        %v1355 = vunpack.c.0.s8 %v1354
        %v1356 = vlaneseq
        %v1357 = vshrl.u32 %v1356, 7
        %v1358 = vsub.s32 %v1355, %v1357
        %v1359 = vrot.slane %v1352, %v1358
        %v1360 = vcombine.low %v1266, %v1267
        %v1362 = vunpack.c.l.s4 1983009808
        %v1363 = vunpack.c.0.s8 %v1362
        %v1364 = vlaneseq
        %v1365 = vshrl.u32 %v1364, 7
        %v1366 = vsub.s32 %v1363, %v1365
        %v1367 = vrot.slane %v1360, %v1366
        %v1368 = vcombine.low %v1343, %v1351
        %v1369 = vcombine.high %v1343, %v1351
        %v1371 = vunpack.c.l.s4 1934713408
        %v1372 = vunpack.c.0.s8 %v1371
        %v1373 = vlaneseq
        %v1374 = vshrl.u32 %v1373, 7
        %v1375 = vsub.s32 %v1372, %v1374
        %v1376 = vrot.slane %v1368, %v1375
        %v1378 = vunpack.c.l.s4 1934713408
        %v1379 = vunpack.c.0.s8 %v1378
        %v1380 = vlaneseq
        %v1381 = vshrl.u32 %v1380, 7
        %v1382 = vsub.s32 %v1379, %v1381
        %v1383 = vrot.slane %v1369, %v1382
        %v1384 = vcombine.low %v1359, %v1367
        %v1385 = vcombine.high %v1359, %v1367
        %v1387 = vunpack.c.l.s4 1934713408
        %v1388 = vunpack.c.0.s8 %v1387
        %v1389 = vlaneseq
        %v1390 = vshrl.u32 %v1389, 7
        %v1391 = vsub.s32 %v1388, %v1390
        %v1392 = vrot.slane %v1384, %v1391
        %v1394 = vunpack.c.l.s4 1934713408
        %v1395 = vunpack.c.0.s8 %v1394
        %v1396 = vlaneseq
        %v1397 = vshrl.u32 %v1396, 7
        %v1398 = vsub.s32 %v1395, %v1397
        %v1399 = vrot.slane %v1385, %v1398
        %v1400 = vcombine.low %v1376, %v1392
        %v1401 = vcombine.high %v1376, %v1392
        %v1402 = vcombine.low %v1383, %v1399
        %v1403 = vcombine.high %v1383, %v1399
        %v1404 = vcombine.low %v1308, %v1315
        %v1406 = vunpack.c.l.s4 1983009808
        %v1407 = vunpack.c.0.s8 %v1406
        %v1408 = vlaneseq
        %v1409 = vshrl.u32 %v1408, 7
        %v1410 = vsub.s32 %v1407, %v1409
        %v1411 = vrot.slane %v1404, %v1410
        %v1412 = vcombine.low %v1332, %v1333
        %v1414 = vunpack.c.l.s4 1983009808
        %v1415 = vunpack.c.0.s8 %v1414
        %v1416 = vlaneseq
        %v1417 = vshrl.u32 %v1416, 7
        %v1418 = vsub.s32 %v1415, %v1417
        %v1419 = vrot.slane %v1412, %v1418
        %v1420 = vcombine.low %v1324, %v1331
        %v1422 = vunpack.c.l.s4 1983009808
        %v1423 = vunpack.c.0.s8 %v1422
        %v1424 = vlaneseq
        %v1425 = vshrl.u32 %v1424, 7
        %v1426 = vsub.s32 %v1423, %v1425
        %v1427 = vrot.slane %v1420, %v1426
        %v1428 = vcombine.low %v1334, %v1335
        %v1430 = vunpack.c.l.s4 1983009808
        %v1431 = vunpack.c.0.s8 %v1430
        %v1432 = vlaneseq
        %v1433 = vshrl.u32 %v1432, 7
        %v1434 = vsub.s32 %v1431, %v1433
        %v1435 = vrot.slane %v1428, %v1434
        %v1436 = vcombine.low %v1411, %v1419
        %v1437 = vcombine.high %v1411, %v1419
        %v1439 = vunpack.c.l.s4 1934713408
        %v1440 = vunpack.c.0.s8 %v1439
        %v1441 = vlaneseq
        %v1442 = vshrl.u32 %v1441, 7
        %v1443 = vsub.s32 %v1440, %v1442
        %v1444 = vrot.slane %v1436, %v1443
        %v1446 = vunpack.c.l.s4 1934713408
        %v1447 = vunpack.c.0.s8 %v1446
        %v1448 = vlaneseq
        %v1449 = vshrl.u32 %v1448, 7
        %v1450 = vsub.s32 %v1447, %v1449
        %v1451 = vrot.slane %v1437, %v1450
        %v1452 = vcombine.low %v1427, %v1435
        %v1453 = vcombine.high %v1427, %v1435
        %v1455 = vunpack.c.l.s4 1934713408
        %v1456 = vunpack.c.0.s8 %v1455
        %v1457 = vlaneseq
        %v1458 = vshrl.u32 %v1457, 7
        %v1459 = vsub.s32 %v1456, %v1458
        %v1460 = vrot.slane %v1452, %v1459
        %v1462 = vunpack.c.l.s4 1934713408
        %v1463 = vunpack.c.0.s8 %v1462
        %v1464 = vlaneseq
        %v1465 = vshrl.u32 %v1464, 7
        %v1466 = vsub.s32 %v1463, %v1465
        %v1467 = vrot.slane %v1453, %v1466
        %v1468 = vcombine.low %v1444, %v1460
        %v1469 = vcombine.high %v1444, %v1460
        %v1470 = vcombine.low %v1451, %v1467
        %v1471 = vcombine.high %v1451, %v1467
        %v1472 = vpack.c.bf16 %v1468, %v1400
        %v1473 = vpack.c.bf16 %v1469, %v1401
        %v1474 = vpack.c.bf16 %v1470, %v1402
        %v1475 = vpack.c.bf16 %v1471, %v1403
        %1478 = vrot.lane.b32.xlu0 %v876, 96
        %v1479 = vpop.permute.xlu0 %1478
        %1480 = vrot.lane.b32.xlu0 %v879, 96
        %v1481 = vpop.permute.xlu0 %1480
        %1484 = vrot.lane.b32.xlu0 %v876, 64
        %v1485 = vpop.permute.xlu0 %1484
        %1486 = vrot.lane.b32.xlu0 %v879, 64
        %v1487 = vpop.permute.xlu0 %1486
        %1490 = vrot.lane.b32.xlu0 %v876, 32
        %v1491 = vpop.permute.xlu0 %1490
        %1492 = vrot.lane.b32.xlu0 %v879, 32
        %v1493 = vpop.permute.xlu0 %1492
        %v1496 = vcombine.low %v876, %v1485
        %v1497 = vcombine.high %v876, %v1485
        %v1499 = vunpack.c.l.s4 1983009808
        %v1500 = vunpack.c.0.s8 %v1499
        %v1501 = vlaneseq
        %v1502 = vshrl.u32 %v1501, 7
        %v1503 = vsub.s32 %v1500, %v1502
        %v1504 = vrot.slane %v1496, %v1503
        %v1506 = vunpack.c.l.s4 1983009808
        %v1507 = vunpack.c.0.s8 %v1506
        %v1508 = vlaneseq
        %v1509 = vshrl.u32 %v1508, 7
        %v1510 = vsub.s32 %v1507, %v1509
        %v1511 = vrot.slane %v1497, %v1510
        %v1512 = vcombine.low %v1479, %v1491
        %v1513 = vcombine.high %v1479, %v1491
        %v1515 = vunpack.c.l.s4 1983009808
        %v1516 = vunpack.c.0.s8 %v1515
        %v1517 = vlaneseq
        %v1518 = vshrl.u32 %v1517, 7
        %v1519 = vsub.s32 %v1516, %v1518
        %v1520 = vrot.slane %v1512, %v1519
        %v1522 = vunpack.c.l.s4 1983009808
        %v1523 = vunpack.c.0.s8 %v1522
        %v1524 = vlaneseq
        %v1525 = vshrl.u32 %v1524, 7
        %v1526 = vsub.s32 %v1523, %v1525
        %v1527 = vrot.slane %v1513, %v1526
        %v1528 = vcombine.low %v1504, %v1520
        %v1529 = vcombine.high %v1504, %v1520
        %v1531 = vunpack.c.l.s4 1934713408
        %v1532 = vunpack.c.0.s8 %v1531
        %v1533 = vlaneseq
        %v1534 = vshrl.u32 %v1533, 7
        %v1535 = vsub.s32 %v1532, %v1534
        %v1536 = vrot.slane %v1528, %v1535
        %v1538 = vunpack.c.l.s4 1934713408
        %v1539 = vunpack.c.0.s8 %v1538
        %v1540 = vlaneseq
        %v1541 = vshrl.u32 %v1540, 7
        %v1542 = vsub.s32 %v1539, %v1541
        %v1543 = vrot.slane %v1529, %v1542
        %v1544 = vcombine.low %v1511, %v1527
        %v1545 = vcombine.high %v1511, %v1527
        %v1547 = vunpack.c.l.s4 1934713408
        %v1548 = vunpack.c.0.s8 %v1547
        %v1549 = vlaneseq
        %v1550 = vshrl.u32 %v1549, 7
        %v1551 = vsub.s32 %v1548, %v1550
        %v1552 = vrot.slane %v1544, %v1551
        %v1554 = vunpack.c.l.s4 1934713408
        %v1555 = vunpack.c.0.s8 %v1554
        %v1556 = vlaneseq
        %v1557 = vshrl.u32 %v1556, 7
        %v1558 = vsub.s32 %v1555, %v1557
        %v1559 = vrot.slane %v1545, %v1558
        %v1560 = vcombine.high %v1536, 0.0
        %v1561 = vcombine.high %v1543, 0.0
        %v1562 = vcombine.high %v1552, 0.0
        %v1563 = vcombine.high %v1559, 0.0
        %v1564 = vcombine.low %v879, %v1487
        %v1565 = vcombine.high %v879, %v1487
        %v1567 = vunpack.c.l.s4 1983009808
        %v1568 = vunpack.c.0.s8 %v1567
        %v1569 = vlaneseq
        %v1570 = vshrl.u32 %v1569, 7
        %v1571 = vsub.s32 %v1568, %v1570
        %v1572 = vrot.slane %v1564, %v1571
        %v1574 = vunpack.c.l.s4 1983009808
        %v1575 = vunpack.c.0.s8 %v1574
        %v1576 = vlaneseq
        %v1577 = vshrl.u32 %v1576, 7
        %v1578 = vsub.s32 %v1575, %v1577
        %v1579 = vrot.slane %v1565, %v1578
        %v1580 = vcombine.low %v1481, %v1493
        %v1581 = vcombine.high %v1481, %v1493
        %v1583 = vunpack.c.l.s4 1983009808
        %v1584 = vunpack.c.0.s8 %v1583
        %v1585 = vlaneseq
        %v1586 = vshrl.u32 %v1585, 7
        %v1587 = vsub.s32 %v1584, %v1586
        %v1588 = vrot.slane %v1580, %v1587
        %v1590 = vunpack.c.l.s4 1983009808
        %v1591 = vunpack.c.0.s8 %v1590
        %v1592 = vlaneseq
        %v1593 = vshrl.u32 %v1592, 7
        %v1594 = vsub.s32 %v1591, %v1593
        %v1595 = vrot.slane %v1581, %v1594
        %v1596 = vcombine.low %v1572, %v1588
        %v1597 = vcombine.high %v1572, %v1588
        %v1599 = vunpack.c.l.s4 1934713408
        %v1600 = vunpack.c.0.s8 %v1599
        %v1601 = vlaneseq
        %v1602 = vshrl.u32 %v1601, 7
        %v1603 = vsub.s32 %v1600, %v1602
        %v1604 = vrot.slane %v1596, %v1603
        %v1606 = vunpack.c.l.s4 1934713408
        %v1607 = vunpack.c.0.s8 %v1606
        %v1608 = vlaneseq
        %v1609 = vshrl.u32 %v1608, 7
        %v1610 = vsub.s32 %v1607, %v1609
        %v1611 = vrot.slane %v1597, %v1610
        %v1612 = vcombine.low %v1579, %v1595
        %v1613 = vcombine.high %v1579, %v1595
        %v1615 = vunpack.c.l.s4 1934713408
        %v1616 = vunpack.c.0.s8 %v1615
        %v1617 = vlaneseq
        %v1618 = vshrl.u32 %v1617, 7
        %v1619 = vsub.s32 %v1616, %v1618
        %v1620 = vrot.slane %v1612, %v1619
        %v1622 = vunpack.c.l.s4 1934713408
        %v1623 = vunpack.c.0.s8 %v1622
        %v1624 = vlaneseq
        %v1625 = vshrl.u32 %v1624, 7
        %v1626 = vsub.s32 %v1623, %v1625
        %v1627 = vrot.slane %v1613, %v1626
        %v1628 = vcombine.high %v1604, 0.0
        %v1629 = vcombine.high %v1611, 0.0
        %v1630 = vcombine.high %v1620, 0.0
        %v1631 = vcombine.high %v1627, 0.0
        %v1632 = vcombine.low %v1536, %v1543
        %v1634 = vunpack.c.l.s4 1983009808
        %v1635 = vunpack.c.0.s8 %v1634
        %v1636 = vlaneseq
        %v1637 = vshrl.u32 %v1636, 7
        %v1638 = vsub.s32 %v1635, %v1637
        %v1639 = vrot.slane %v1632, %v1638
        %v1640 = vcombine.low %v1560, %v1561
        %v1642 = vunpack.c.l.s4 1983009808
        %v1643 = vunpack.c.0.s8 %v1642
        %v1644 = vlaneseq
        %v1645 = vshrl.u32 %v1644, 7
        %v1646 = vsub.s32 %v1643, %v1645
        %v1647 = vrot.slane %v1640, %v1646
        %v1648 = vcombine.low %v1552, %v1559
        %v1650 = vunpack.c.l.s4 1983009808
        %v1651 = vunpack.c.0.s8 %v1650
        %v1652 = vlaneseq
        %v1653 = vshrl.u32 %v1652, 7
        %v1654 = vsub.s32 %v1651, %v1653
        %v1655 = vrot.slane %v1648, %v1654
        %v1656 = vcombine.low %v1562, %v1563
        %v1658 = vunpack.c.l.s4 1983009808
        %v1659 = vunpack.c.0.s8 %v1658
        %v1660 = vlaneseq
        %v1661 = vshrl.u32 %v1660, 7
        %v1662 = vsub.s32 %v1659, %v1661
        %v1663 = vrot.slane %v1656, %v1662
        %v1664 = vcombine.low %v1639, %v1647
        %v1665 = vcombine.high %v1639, %v1647
        %v1667 = vunpack.c.l.s4 1934713408
        %v1668 = vunpack.c.0.s8 %v1667
        %v1669 = vlaneseq
        %v1670 = vshrl.u32 %v1669, 7
        %v1671 = vsub.s32 %v1668, %v1670
        %v1672 = vrot.slane %v1664, %v1671
        %v1674 = vunpack.c.l.s4 1934713408
        %v1675 = vunpack.c.0.s8 %v1674
        %v1676 = vlaneseq
        %v1677 = vshrl.u32 %v1676, 7
        %v1678 = vsub.s32 %v1675, %v1677
        %v1679 = vrot.slane %v1665, %v1678
        %v1680 = vcombine.low %v1655, %v1663
        %v1681 = vcombine.high %v1655, %v1663
        %v1683 = vunpack.c.l.s4 1934713408
        %v1684 = vunpack.c.0.s8 %v1683
        %v1685 = vlaneseq
        %v1686 = vshrl.u32 %v1685, 7
        %v1687 = vsub.s32 %v1684, %v1686
        %v1688 = vrot.slane %v1680, %v1687
        %v1690 = vunpack.c.l.s4 1934713408
        %v1691 = vunpack.c.0.s8 %v1690
        %v1692 = vlaneseq
        %v1693 = vshrl.u32 %v1692, 7
        %v1694 = vsub.s32 %v1691, %v1693
        %v1695 = vrot.slane %v1681, %v1694
        %v1696 = vcombine.low %v1672, %v1688
        %v1697 = vcombine.high %v1672, %v1688
        %v1698 = vcombine.low %v1679, %v1695
        %v1699 = vcombine.high %v1679, %v1695
        %v1700 = vcombine.low %v1604, %v1611
        %v1702 = vunpack.c.l.s4 1983009808
        %v1703 = vunpack.c.0.s8 %v1702
        %v1704 = vlaneseq
        %v1705 = vshrl.u32 %v1704, 7
        %v1706 = vsub.s32 %v1703, %v1705
        %v1707 = vrot.slane %v1700, %v1706
        %v1708 = vcombine.low %v1628, %v1629
        %v1710 = vunpack.c.l.s4 1983009808
        %v1711 = vunpack.c.0.s8 %v1710
        %v1712 = vlaneseq
        %v1713 = vshrl.u32 %v1712, 7
        %v1714 = vsub.s32 %v1711, %v1713
        %v1715 = vrot.slane %v1708, %v1714
        %v1716 = vcombine.low %v1620, %v1627
        %v1718 = vunpack.c.l.s4 1983009808
        %v1719 = vunpack.c.0.s8 %v1718
        %v1720 = vlaneseq
        %v1721 = vshrl.u32 %v1720, 7
        %v1722 = vsub.s32 %v1719, %v1721
        %v1723 = vrot.slane %v1716, %v1722
        %v1724 = vcombine.low %v1630, %v1631
        %v1726 = vunpack.c.l.s4 1983009808
        %v1727 = vunpack.c.0.s8 %v1726
        %v1728 = vlaneseq
        %v1729 = vshrl.u32 %v1728, 7
        %v1730 = vsub.s32 %v1727, %v1729
        %v1731 = vrot.slane %v1724, %v1730
        %v1732 = vcombine.low %v1707, %v1715
        %v1733 = vcombine.high %v1707, %v1715
        %v1735 = vunpack.c.l.s4 1934713408
        %v1736 = vunpack.c.0.s8 %v1735
        %v1737 = vlaneseq
        %v1738 = vshrl.u32 %v1737, 7
        %v1739 = vsub.s32 %v1736, %v1738
        %v1740 = vrot.slane %v1732, %v1739
        %v1742 = vunpack.c.l.s4 1934713408
        %v1743 = vunpack.c.0.s8 %v1742
        %v1744 = vlaneseq
        %v1745 = vshrl.u32 %v1744, 7
        %v1746 = vsub.s32 %v1743, %v1745
        %v1747 = vrot.slane %v1733, %v1746
        %v1748 = vcombine.low %v1723, %v1731
        %v1749 = vcombine.high %v1723, %v1731
        %v1751 = vunpack.c.l.s4 1934713408
        %v1752 = vunpack.c.0.s8 %v1751
        %v1753 = vlaneseq
        %v1754 = vshrl.u32 %v1753, 7
        %v1755 = vsub.s32 %v1752, %v1754
        %v1756 = vrot.slane %v1748, %v1755
        %v1758 = vunpack.c.l.s4 1934713408
        %v1759 = vunpack.c.0.s8 %v1758
        %v1760 = vlaneseq
        %v1761 = vshrl.u32 %v1760, 7
        %v1762 = vsub.s32 %v1759, %v1761
        %v1763 = vrot.slane %v1749, %v1762
        %v1764 = vcombine.low %v1740, %v1756
        %v1765 = vcombine.high %v1740, %v1756
        %v1766 = vcombine.low %v1747, %v1763
        %v1767 = vcombine.high %v1747, %v1763
        %v1768 = vpack.c.bf16 %v1764, %v1696
        %v1769 = vpack.c.bf16 %v1765, %v1697
        %v1770 = vpack.c.bf16 %v1766, %v1698
        %v1771 = vpack.c.bf16 %v1767, %v1699
        %vm1772 = vcmask 261120
        %v1774 = vsel %vm1772, %v1176, 0
        %v1777 = vsel %vm1772, %v1472, 0
        %1779 = vmatprep.subr.bf16.mxu0 0
        %1780 = vmatpush1.bf16.xpose.msra.mxu0 %v1777
        %1781 = vmatprep.subr.bf16.mxu0 0
        %1782 = vmatpush1.bf16.xpose.msra.mxu0 0
        %1783 = vmatprep.subr.bf16.mxu0 0
        %1784 = vmatpush1.bf16.xpose.msra.mxu0 0
        %1785 = vmatprep.subr.bf16.mxu0 0
        %1786 = vmatpush1.bf16.xpose.msra.mxu0 0
        %1787 = vmatprep.subr.bf16.mxu0 0
        %1788 = vmatpush1.bf16.xpose.msra.mxu0 0
        %1789 = vmatprep.subr.bf16.mxu0 0
        %1790 = vmatpush1.bf16.xpose.msra.mxu0 0
        %1791 = vmatprep.subr.bf16.mxu0 0
        %1792 = vmatpush1.bf16.xpose.msra.mxu0 0
        %1793 = vmatprep.subr.bf16.mxu0 0
        %1794 = vmatpush1.bf16.xpose.msra.mxu0 0
        %1795 = vmatprep.subr.bf16.mxu0 0
        %1796 = vmatpush1.bf16.xpose.msra.mxu0 0
        %1797 = vmatprep.subr.bf16.mxu0 0
        %1798 = vmatpush1.bf16.xpose.msra.mxu0 0
        %1799 = vmatprep.subr.bf16.mxu0 0
        %1800 = vmatpush1.bf16.xpose.msra.mxu0 0
        %1801 = vmatprep.subr.bf16.mxu0 0
        %1802 = vmatpush1.bf16.xpose.msra.mxu0 0
        %1803 = vmatprep.subr.bf16.mxu0 0
        %1804 = vmatpush1.bf16.xpose.msra.mxu0 0
        %1805 = vmatprep.subr.bf16.mxu0 0
        %1806 = vmatpush1.bf16.xpose.msra.mxu0 0
        %1807 = vmatprep.subr.bf16.mxu0 0
        %1808 = vmatpush1.bf16.xpose.msra.mxu0 0
        %1809 = vmatprep.subr.bf16.mxu0 0
        %1810 = vmatpush1.bf16.xpose.msra.mxu0 0
        %1811 = vmatprep.mubr.bf16.mxu0 0
        %1812 = vmatmul.mubr.bf16.gmra.mrb[0].mxu0 %v1774
        %v1813 = vpop.f32.mrb[0].mxu0
        %v1814 = vadd.f32 0.0, %v1813
        %v1815 = vpop.f32.mrb[0].mxu0
        %v1816 = vpop.f32.mrb[0].mxu0
        %v1817 = vadd.f32 0.0, %v1816
        %v1818 = vpop.f32.mrb[0].mxu0
        %1819 = vdwg.mxu0
        %v1821 = vsel %vm1772, %v1177, 0
        %v1824 = vsel %vm1772, %v1473, 0
        %1826 = vmatprep.subr.bf16.mxu0 0
        %1827 = vmatpush1.bf16.xpose.msra.mxu0 %v1824
        %1828 = vmatprep.subr.bf16.mxu0 0
        %1829 = vmatpush1.bf16.xpose.msra.mxu0 0
        %1830 = vmatprep.subr.bf16.mxu0 0
        %1831 = vmatpush1.bf16.xpose.msra.mxu0 0
        %1832 = vmatprep.subr.bf16.mxu0 0
        %1833 = vmatpush1.bf16.xpose.msra.mxu0 0
        %1834 = vmatprep.subr.bf16.mxu0 0
        %1835 = vmatpush1.bf16.xpose.msra.mxu0 0
        %1836 = vmatprep.subr.bf16.mxu0 0
        %1837 = vmatpush1.bf16.xpose.msra.mxu0 0
        %1838 = vmatprep.subr.bf16.mxu0 0
        %1839 = vmatpush1.bf16.xpose.msra.mxu0 0
        %1840 = vmatprep.subr.bf16.mxu0 0
        %1841 = vmatpush1.bf16.xpose.msra.mxu0 0
        %1842 = vmatprep.subr.bf16.mxu0 0
        %1843 = vmatpush1.bf16.xpose.msra.mxu0 0
        %1844 = vmatprep.subr.bf16.mxu0 0
        %1845 = vmatpush1.bf16.xpose.msra.mxu0 0
        %1846 = vmatprep.subr.bf16.mxu0 0
        %1847 = vmatpush1.bf16.xpose.msra.mxu0 0
        %1848 = vmatprep.subr.bf16.mxu0 0
        %1849 = vmatpush1.bf16.xpose.msra.mxu0 0
        %1850 = vmatprep.subr.bf16.mxu0 0
        %1851 = vmatpush1.bf16.xpose.msra.mxu0 0
        %1852 = vmatprep.subr.bf16.mxu0 0
        %1853 = vmatpush1.bf16.xpose.msra.mxu0 0
        %1854 = vmatprep.subr.bf16.mxu0 0
        %1855 = vmatpush1.bf16.xpose.msra.mxu0 0
        %1856 = vmatprep.subr.bf16.mxu0 0
        %1857 = vmatpush1.bf16.xpose.msra.mxu0 0
        %1858 = vmatprep.mubr.bf16.mxu0 0
        %1859 = vmatmul.mubr.bf16.gmra.mrb[0].mxu0 %v1821
        %v1860 = vpop.f32.mrb[0].mxu0
        %v1861 = vadd.f32 0.0, %v1860
        %v1862 = vpop.f32.mrb[0].mxu0
        %v1863 = vpop.f32.mrb[0].mxu0
        %v1864 = vadd.f32 0.0, %v1863
        %v1865 = vpop.f32.mrb[0].mxu0
        %1866 = vdwg.mxu0
        %v1868 = vsel %vm1772, %v1178, 0
        %v1871 = vsel %vm1772, %v1474, 0
        %1873 = vmatprep.subr.bf16.mxu0 0
        %1874 = vmatpush1.bf16.xpose.msra.mxu0 %v1871
        %1875 = vmatprep.subr.bf16.mxu0 0
        %1876 = vmatpush1.bf16.xpose.msra.mxu0 0
        %1877 = vmatprep.subr.bf16.mxu0 0
        %1878 = vmatpush1.bf16.xpose.msra.mxu0 0
        %1879 = vmatprep.subr.bf16.mxu0 0
        %1880 = vmatpush1.bf16.xpose.msra.mxu0 0
        %1881 = vmatprep.subr.bf16.mxu0 0
        %1882 = vmatpush1.bf16.xpose.msra.mxu0 0
        %1883 = vmatprep.subr.bf16.mxu0 0
        %1884 = vmatpush1.bf16.xpose.msra.mxu0 0
        %1885 = vmatprep.subr.bf16.mxu0 0
        %1886 = vmatpush1.bf16.xpose.msra.mxu0 0
        %1887 = vmatprep.subr.bf16.mxu0 0
        %1888 = vmatpush1.bf16.xpose.msra.mxu0 0
        %1889 = vmatprep.subr.bf16.mxu0 0
        %1890 = vmatpush1.bf16.xpose.msra.mxu0 0
        %1891 = vmatprep.subr.bf16.mxu0 0
        %1892 = vmatpush1.bf16.xpose.msra.mxu0 0
        %1893 = vmatprep.subr.bf16.mxu0 0
        %1894 = vmatpush1.bf16.xpose.msra.mxu0 0
        %1895 = vmatprep.subr.bf16.mxu0 0
        %1896 = vmatpush1.bf16.xpose.msra.mxu0 0
        %1897 = vmatprep.subr.bf16.mxu0 0
        %1898 = vmatpush1.bf16.xpose.msra.mxu0 0
        %1899 = vmatprep.subr.bf16.mxu0 0
        %1900 = vmatpush1.bf16.xpose.msra.mxu0 0
        %1901 = vmatprep.subr.bf16.mxu0 0
        %1902 = vmatpush1.bf16.xpose.msra.mxu0 0
        %1903 = vmatprep.subr.bf16.mxu0 0
        %1904 = vmatpush1.bf16.xpose.msra.mxu0 0
        %1905 = vmatprep.mubr.bf16.mxu0 0
        %1906 = vmatmul.mubr.bf16.gmra.mrb[0].mxu0 %v1868
        %v1907 = vpop.f32.mrb[0].mxu0
        %v1908 = vadd.f32 0.0, %v1907
        %v1909 = vpop.f32.mrb[0].mxu0
        %v1910 = vpop.f32.mrb[0].mxu0
        %v1911 = vadd.f32 0.0, %v1910
        %v1912 = vpop.f32.mrb[0].mxu0
        %1913 = vdwg.mxu0
        %v1915 = vsel %vm1772, %v1179, 0
        %v1918 = vsel %vm1772, %v1475, 0
        %1920 = vmatprep.subr.bf16.mxu0 0
        %1921 = vmatpush1.bf16.xpose.msra.mxu0 %v1918
        %1922 = vmatprep.subr.bf16.mxu0 0
        %1923 = vmatpush1.bf16.xpose.msra.mxu0 0
        %1924 = vmatprep.subr.bf16.mxu0 0
        %1925 = vmatpush1.bf16.xpose.msra.mxu0 0
        %1926 = vmatprep.subr.bf16.mxu0 0
        %1927 = vmatpush1.bf16.xpose.msra.mxu0 0
        %1928 = vmatprep.subr.bf16.mxu0 0
        %1929 = vmatpush1.bf16.xpose.msra.mxu0 0
        %1930 = vmatprep.subr.bf16.mxu0 0
        %1931 = vmatpush1.bf16.xpose.msra.mxu0 0
        %1932 = vmatprep.subr.bf16.mxu0 0
        %1933 = vmatpush1.bf16.xpose.msra.mxu0 0
        %1934 = vmatprep.subr.bf16.mxu0 0
        %1935 = vmatpush1.bf16.xpose.msra.mxu0 0
        %1936 = vmatprep.subr.bf16.mxu0 0
        %1937 = vmatpush1.bf16.xpose.msra.mxu0 0
        %1938 = vmatprep.subr.bf16.mxu0 0
        %1939 = vmatpush1.bf16.xpose.msra.mxu0 0
        %1940 = vmatprep.subr.bf16.mxu0 0
        %1941 = vmatpush1.bf16.xpose.msra.mxu0 0
        %1942 = vmatprep.subr.bf16.mxu0 0
        %1943 = vmatpush1.bf16.xpose.msra.mxu0 0
        %1944 = vmatprep.subr.bf16.mxu0 0
        %1945 = vmatpush1.bf16.xpose.msra.mxu0 0
        %1946 = vmatprep.subr.bf16.mxu0 0
        %1947 = vmatpush1.bf16.xpose.msra.mxu0 0
        %1948 = vmatprep.subr.bf16.mxu0 0
        %1949 = vmatpush1.bf16.xpose.msra.mxu0 0
        %1950 = vmatprep.subr.bf16.mxu0 0
        %1951 = vmatpush1.bf16.xpose.msra.mxu0 0
        %1952 = vmatprep.mubr.bf16.mxu0 0
        %1953 = vmatmul.mubr.bf16.gmra.mrb[0].mxu0 %v1915
        %v1954 = vpop.f32.mrb[0].mxu0
        %v1955 = vadd.f32 0.0, %v1954
        %v1956 = vpop.f32.mrb[0].mxu0
        %v1957 = vpop.f32.mrb[0].mxu0
        %v1958 = vadd.f32 0.0, %v1957
        %v1959 = vpop.f32.mrb[0].mxu0
        %1960 = vdwg.mxu0
        %vm1961 = vcmask 130048
        %v1962 = vsel %vm1961, %v1814, -inf
        %1963 = vmax.xlane.f32.xlu0 %v1962
        %v1964 = vpop.xlane.xlu0 %1963
        %v1965 = vsel %vm1961, %v1817, -inf
        %1966 = vmax.xlane.f32.xlu0 %v1965
        %v1967 = vpop.xlane.xlu0 %1966
        %v1968 = vsel %vm1961, %v1861, -inf
        %1969 = vmax.xlane.f32.xlu0 %v1968
        %v1970 = vpop.xlane.xlu0 %1969
        %v1971 = vsel %vm1961, %v1864, -inf
        %1972 = vmax.xlane.f32.xlu0 %v1971
        %v1973 = vpop.xlane.xlu0 %1972
        %v1974 = vsel %vm1961, %v1908, -inf
        %1975 = vmax.xlane.f32.xlu0 %v1974
        %v1976 = vpop.xlane.xlu0 %1975
        %v1977 = vsel %vm1961, %v1911, -inf
        %1978 = vmax.xlane.f32.xlu0 %v1977
        %v1979 = vpop.xlane.xlu0 %1978
        %v1980 = vsel %vm1961, %v1955, -inf
        %1981 = vmax.xlane.f32.xlu0 %v1980
        %v1982 = vpop.xlane.xlu0 %1981
        %v1983 = vsel %vm1961, %v1958, -inf
        %1984 = vmax.xlane.f32.xlu0 %v1983
        %v1985 = vpop.xlane.xlu0 %1984
        %v1986 = vsub.f32 %v1814, %v1964
        %v1987 = vsub.f32 %v1817, %v1967
        %v1988 = vsub.f32 %v1861, %v1970
        %v1989 = vsub.f32 %v1864, %v1973
        %v1990 = vsub.f32 %v1908, %v1976
        %v1991 = vsub.f32 %v1911, %v1979
        %v1992 = vsub.f32 %v1955, %v1982
        %v1993 = vsub.f32 %v1958, %v1985
        %v1994 = vmul.f32 %v1986, 1.442695
        %v1995 = vpow.pop %v1994
        %v1996 = vmul.f32 %v1987, 1.442695
        %v1997 = vpow.pop %v1996
        %v1998 = vmul.f32 %v1988, 1.442695
        %v1999 = vpow.pop %v1998
        %v2000 = vmul.f32 %v1989, 1.442695
        %v2001 = vpow.pop %v2000
        %v2002 = vmul.f32 %v1990, 1.442695
        %v2003 = vpow.pop %v2002
        %v2004 = vmul.f32 %v1991, 1.442695
        %v2005 = vpow.pop %v2004
        %v2006 = vmul.f32 %v1992, 1.442695
        %v2007 = vpow.pop %v2006
        %v2008 = vmul.f32 %v1993, 1.442695
        %v2009 = vpow.pop %v2008
        %v2010 = vsel %vm1961, %v1995, 0.0
        %2011 = vadd.xlane.f32.xlu0 %v2010
        %v2012 = vpop.xlane.xlu0 %2011
        %v2013 = vsel %vm1961, %v1997, 0.0
        %2014 = vadd.xlane.f32.xlu0 %v2013
        %v2015 = vpop.xlane.xlu0 %2014
        %v2016 = vsel %vm1961, %v1999, 0.0
        %2017 = vadd.xlane.f32.xlu0 %v2016
        %v2018 = vpop.xlane.xlu0 %2017
        %v2019 = vsel %vm1961, %v2001, 0.0
        %2020 = vadd.xlane.f32.xlu0 %v2019
        %v2021 = vpop.xlane.xlu0 %2020
        %v2022 = vsel %vm1961, %v2003, 0.0
        %2023 = vadd.xlane.f32.xlu0 %v2022
        %v2024 = vpop.xlane.xlu0 %2023
        %v2025 = vsel %vm1961, %v2005, 0.0
        %2026 = vadd.xlane.f32.xlu0 %v2025
        %v2027 = vpop.xlane.xlu0 %2026
        %v2028 = vsel %vm1961, %v2007, 0.0
        %2029 = vadd.xlane.f32.xlu0 %v2028
        %v2030 = vpop.xlane.xlu0 %2029
        %v2031 = vsel %vm1961, %v2009, 0.0
        %2032 = vadd.xlane.f32.xlu0 %v2031
        %v2033 = vpop.xlane.xlu0 %2032
        %v2034 = vrcp.pop %v2012
        %v2035 = vrcp.pop %v2015
        %v2036 = vrcp.pop %v2018
        %v2037 = vrcp.pop %v2021
        %v2038 = vrcp.pop %v2024
        %v2039 = vrcp.pop %v2027
        %v2040 = vrcp.pop %v2030
        %v2041 = vrcp.pop %v2033
        %v2042 = vmul.f32 %v1995, %v2034
        %v2043 = vmul.f32 %v1997, %v2035
        %v2044 = vmul.f32 %v1999, %v2036
        %v2045 = vmul.f32 %v2001, %v2037
        %v2046 = vmul.f32 %v2003, %v2038
        %v2047 = vmul.f32 %v2005, %v2039
        %v2048 = vmul.f32 %v2007, %v2040
        %v2049 = vmul.f32 %v2009, %v2041
        %v2050 = vpack.c.bf16 %v2043, %v2042
        %v2051 = vpack.c.bf16 %v2045, %v2044
        %v2052 = vpack.c.bf16 %v2047, %v2046
        %v2053 = vpack.c.bf16 %v2049, %v2048
        %v2055 = vsel %vm1961, %v2050, 0
        %2057 = vmatprep.subr.bf16.mxu0 0
        %2058 = vmatpush1.bf16.msra.mxu0 %v1768
        %2059 = vmatprep.subr.bf16.mxu0 0
        %2060 = vmatpush1.bf16.msra.mxu0 0
        %2061 = vmatprep.subr.bf16.mxu0 0
        %2062 = vmatpush1.bf16.msra.mxu0 0
        %2063 = vmatprep.subr.bf16.mxu0 0
        %2064 = vmatpush1.bf16.msra.mxu0 0
        %2065 = vmatprep.subr.bf16.mxu0 0
        %2066 = vmatpush1.bf16.msra.mxu0 0
        %2067 = vmatprep.subr.bf16.mxu0 0
        %2068 = vmatpush1.bf16.msra.mxu0 0
        %2069 = vmatprep.subr.bf16.mxu0 0
        %2070 = vmatpush1.bf16.msra.mxu0 0
        %2071 = vmatprep.subr.bf16.mxu0 0
        %2072 = vmatpush1.bf16.msra.mxu0 0
        %2073 = vmatprep.subr.bf16.mxu0 0
        %2074 = vmatpush1.bf16.msra.mxu0 0
        %2075 = vmatprep.subr.bf16.mxu0 0
        %2076 = vmatpush1.bf16.msra.mxu0 0
        %2077 = vmatprep.subr.bf16.mxu0 0
        %2078 = vmatpush1.bf16.msra.mxu0 0
        %2079 = vmatprep.subr.bf16.mxu0 0
        %2080 = vmatpush1.bf16.msra.mxu0 0
        %2081 = vmatprep.subr.bf16.mxu0 0
        %2082 = vmatpush1.bf16.msra.mxu0 0
        %2083 = vmatprep.subr.bf16.mxu0 0
        %2084 = vmatpush1.bf16.msra.mxu0 0
        %2085 = vmatprep.subr.bf16.mxu0 0
        %2086 = vmatpush1.bf16.msra.mxu0 0
        %2087 = vmatprep.subr.bf16.mxu0 0
        %2088 = vmatpush1.bf16.msra.mxu0 0
        %2089 = vmatprep.mubr.bf16.mxu0 0
        %2090 = vmatmul.mubr.bf16.gmra.mrb[0].mxu0 %v2055
        %v2091 = vpop.f32.mrb[0].mxu0
        %v2092 = vadd.f32 0.0, %v2091
        %v2093 = vpop.f32.mrb[0].mxu0
        %v2094 = vpop.f32.mrb[0].mxu0
        %v2095 = vadd.f32 0.0, %v2094
        %v2096 = vpop.f32.mrb[0].mxu0
        %2097 = vdwg.mxu0
        %v2099 = vsel %vm1961, %v2051, 0
        %2101 = vmatprep.subr.bf16.mxu0 0
        %2102 = vmatpush1.bf16.msra.mxu0 %v1769
        %2103 = vmatprep.subr.bf16.mxu0 0
        %2104 = vmatpush1.bf16.msra.mxu0 0
        %2105 = vmatprep.subr.bf16.mxu0 0
        %2106 = vmatpush1.bf16.msra.mxu0 0
        %2107 = vmatprep.subr.bf16.mxu0 0
        %2108 = vmatpush1.bf16.msra.mxu0 0
        %2109 = vmatprep.subr.bf16.mxu0 0
        %2110 = vmatpush1.bf16.msra.mxu0 0
        %2111 = vmatprep.subr.bf16.mxu0 0
        %2112 = vmatpush1.bf16.msra.mxu0 0
        %2113 = vmatprep.subr.bf16.mxu0 0
        %2114 = vmatpush1.bf16.msra.mxu0 0
        %2115 = vmatprep.subr.bf16.mxu0 0
        %2116 = vmatpush1.bf16.msra.mxu0 0
        %2117 = vmatprep.subr.bf16.mxu0 0
        %2118 = vmatpush1.bf16.msra.mxu0 0
        %2119 = vmatprep.subr.bf16.mxu0 0
        %2120 = vmatpush1.bf16.msra.mxu0 0
        %2121 = vmatprep.subr.bf16.mxu0 0
        %2122 = vmatpush1.bf16.msra.mxu0 0
        %2123 = vmatprep.subr.bf16.mxu0 0
        %2124 = vmatpush1.bf16.msra.mxu0 0
        %2125 = vmatprep.subr.bf16.mxu0 0
        %2126 = vmatpush1.bf16.msra.mxu0 0
        %2127 = vmatprep.subr.bf16.mxu0 0
        %2128 = vmatpush1.bf16.msra.mxu0 0
        %2129 = vmatprep.subr.bf16.mxu0 0
        %2130 = vmatpush1.bf16.msra.mxu0 0
        %2131 = vmatprep.subr.bf16.mxu0 0
        %2132 = vmatpush1.bf16.msra.mxu0 0
        %2133 = vmatprep.mubr.bf16.mxu0 0
        %2134 = vmatmul.mubr.bf16.gmra.mrb[0].mxu0 %v2099
        %v2135 = vpop.f32.mrb[0].mxu0
        %v2136 = vadd.f32 0.0, %v2135
        %v2137 = vpop.f32.mrb[0].mxu0
        %v2138 = vpop.f32.mrb[0].mxu0
        %v2139 = vadd.f32 0.0, %v2138
        %v2140 = vpop.f32.mrb[0].mxu0
        %2141 = vdwg.mxu0
        %v2143 = vsel %vm1961, %v2052, 0
        %2145 = vmatprep.subr.bf16.mxu0 0
        %2146 = vmatpush1.bf16.msra.mxu0 %v1770
        %2147 = vmatprep.subr.bf16.mxu0 0
        %2148 = vmatpush1.bf16.msra.mxu0 0
        %2149 = vmatprep.subr.bf16.mxu0 0
        %2150 = vmatpush1.bf16.msra.mxu0 0
        %2151 = vmatprep.subr.bf16.mxu0 0
        %2152 = vmatpush1.bf16.msra.mxu0 0
        %2153 = vmatprep.subr.bf16.mxu0 0
        %2154 = vmatpush1.bf16.msra.mxu0 0
        %2155 = vmatprep.subr.bf16.mxu0 0
        %2156 = vmatpush1.bf16.msra.mxu0 0
        %2157 = vmatprep.subr.bf16.mxu0 0
        %2158 = vmatpush1.bf16.msra.mxu0 0
        %2159 = vmatprep.subr.bf16.mxu0 0
        %2160 = vmatpush1.bf16.msra.mxu0 0
        %2161 = vmatprep.subr.bf16.mxu0 0
        %2162 = vmatpush1.bf16.msra.mxu0 0
        %2163 = vmatprep.subr.bf16.mxu0 0
        %2164 = vmatpush1.bf16.msra.mxu0 0
        %2165 = vmatprep.subr.bf16.mxu0 0
        %2166 = vmatpush1.bf16.msra.mxu0 0
        %2167 = vmatprep.subr.bf16.mxu0 0
        %2168 = vmatpush1.bf16.msra.mxu0 0
        %2169 = vmatprep.subr.bf16.mxu0 0
        %2170 = vmatpush1.bf16.msra.mxu0 0
        %2171 = vmatprep.subr.bf16.mxu0 0
        %2172 = vmatpush1.bf16.msra.mxu0 0
        %2173 = vmatprep.subr.bf16.mxu0 0
        %2174 = vmatpush1.bf16.msra.mxu0 0
        %2175 = vmatprep.subr.bf16.mxu0 0
        %2176 = vmatpush1.bf16.msra.mxu0 0
        %2177 = vmatprep.mubr.bf16.mxu0 0
        %2178 = vmatmul.mubr.bf16.gmra.mrb[0].mxu0 %v2143
        %v2179 = vpop.f32.mrb[0].mxu0
        %v2180 = vadd.f32 0.0, %v2179
        %v2181 = vpop.f32.mrb[0].mxu0
        %v2182 = vpop.f32.mrb[0].mxu0
        %v2183 = vadd.f32 0.0, %v2182
        %v2184 = vpop.f32.mrb[0].mxu0
        %2185 = vdwg.mxu0
        %v2187 = vsel %vm1961, %v2053, 0
        %2189 = vmatprep.subr.bf16.mxu0 0
        %2190 = vmatpush1.bf16.msra.mxu0 %v1771
        %2191 = vmatprep.subr.bf16.mxu0 0
        %2192 = vmatpush1.bf16.msra.mxu0 0
        %2193 = vmatprep.subr.bf16.mxu0 0
        %2194 = vmatpush1.bf16.msra.mxu0 0
        %2195 = vmatprep.subr.bf16.mxu0 0
        %2196 = vmatpush1.bf16.msra.mxu0 0
        %2197 = vmatprep.subr.bf16.mxu0 0
        %2198 = vmatpush1.bf16.msra.mxu0 0
        %2199 = vmatprep.subr.bf16.mxu0 0
        %2200 = vmatpush1.bf16.msra.mxu0 0
        %2201 = vmatprep.subr.bf16.mxu0 0
        %2202 = vmatpush1.bf16.msra.mxu0 0
        %2203 = vmatprep.subr.bf16.mxu0 0
        %2204 = vmatpush1.bf16.msra.mxu0 0
        %2205 = vmatprep.subr.bf16.mxu0 0
        %2206 = vmatpush1.bf16.msra.mxu0 0
        %2207 = vmatprep.subr.bf16.mxu0 0
        %2208 = vmatpush1.bf16.msra.mxu0 0
        %2209 = vmatprep.subr.bf16.mxu0 0
        %2210 = vmatpush1.bf16.msra.mxu0 0
        %2211 = vmatprep.subr.bf16.mxu0 0
        %2212 = vmatpush1.bf16.msra.mxu0 0
        %2213 = vmatprep.subr.bf16.mxu0 0
        %2214 = vmatpush1.bf16.msra.mxu0 0
        %2215 = vmatprep.subr.bf16.mxu0 0
        %2216 = vmatpush1.bf16.msra.mxu0 0
        %2217 = vmatprep.subr.bf16.mxu0 0
        %2218 = vmatpush1.bf16.msra.mxu0 0
        %2219 = vmatprep.subr.bf16.mxu0 0
        %2220 = vmatpush1.bf16.msra.mxu0 0
        %2221 = vmatprep.mubr.bf16.mxu0 0
        %2222 = vmatmul.mubr.bf16.gmra.mrb[0].mxu0 %v2187
        %v2223 = vpop.f32.mrb[0].mxu0
        %v2224 = vadd.f32 0.0, %v2223
        %v2225 = vpop.f32.mrb[0].mxu0
        %v2226 = vpop.f32.mrb[0].mxu0
        %v2227 = vadd.f32 0.0, %v2226
        %v2228 = vpop.f32.mrb[0].mxu0
        %2229 = vdwg.mxu0
        %v2230 = vcombine.low %v2092, %v2180
        %v2231 = vcombine.high %v2092, %v2180
        %v2233 = vunpack.c.l.s4 1983009808
        %v2234 = vunpack.c.0.s8 %v2233
        %v2235 = vlaneseq
        %v2236 = vshrl.u32 %v2235, 7
        %v2237 = vsub.s32 %v2234, %v2236
        %v2238 = vrot.slane %v2230, %v2237
        %v2240 = vunpack.c.l.s4 1983009808
        %v2241 = vunpack.c.0.s8 %v2240
        %v2242 = vlaneseq
        %v2243 = vshrl.u32 %v2242, 7
        %v2244 = vsub.s32 %v2241, %v2243
        %v2245 = vrot.slane %v2231, %v2244
        %v2246 = vcombine.low %v2136, %v2224
        %v2247 = vcombine.high %v2136, %v2224
        %v2249 = vunpack.c.l.s4 1983009808
        %v2250 = vunpack.c.0.s8 %v2249
        %v2251 = vlaneseq
        %v2252 = vshrl.u32 %v2251, 7
        %v2253 = vsub.s32 %v2250, %v2252
        %v2254 = vrot.slane %v2246, %v2253
        %v2256 = vunpack.c.l.s4 1983009808
        %v2257 = vunpack.c.0.s8 %v2256
        %v2258 = vlaneseq
        %v2259 = vshrl.u32 %v2258, 7
        %v2260 = vsub.s32 %v2257, %v2259
        %v2261 = vrot.slane %v2247, %v2260
        %v2262 = vcombine.low %v2238, %v2254
        %v2263 = vcombine.high %v2238, %v2254
        %v2265 = vunpack.c.l.s4 1934713408
        %v2266 = vunpack.c.0.s8 %v2265
        %v2267 = vlaneseq
        %v2268 = vshrl.u32 %v2267, 7
        %v2269 = vsub.s32 %v2266, %v2268
        %v2270 = vrot.slane %v2262, %v2269
        %v2272 = vunpack.c.l.s4 1934713408
        %v2273 = vunpack.c.0.s8 %v2272
        %v2274 = vlaneseq
        %v2275 = vshrl.u32 %v2274, 7
        %v2276 = vsub.s32 %v2273, %v2275
        %v2277 = vrot.slane %v2263, %v2276
        %v2278 = vcombine.low %v2245, %v2261
        %v2279 = vcombine.high %v2245, %v2261
        %v2281 = vunpack.c.l.s4 1934713408
        %v2282 = vunpack.c.0.s8 %v2281
        %v2283 = vlaneseq
        %v2284 = vshrl.u32 %v2283, 7
        %v2285 = vsub.s32 %v2282, %v2284
        %v2286 = vrot.slane %v2278, %v2285
        %v2288 = vunpack.c.l.s4 1934713408
        %v2289 = vunpack.c.0.s8 %v2288
        %v2290 = vlaneseq
        %v2291 = vshrl.u32 %v2290, 7
        %v2292 = vsub.s32 %v2289, %v2291
        %v2293 = vrot.slane %v2279, %v2292
        %v2294 = vcombine.high %v2270, 0.0
        %v2295 = vcombine.high %v2277, 0.0
        %v2296 = vcombine.high %v2286, 0.0
        %v2297 = vcombine.high %v2293, 0.0
        %v2298 = vcombine.low %v2095, %v2183
        %v2299 = vcombine.high %v2095, %v2183
        %v2301 = vunpack.c.l.s4 1983009808
        %v2302 = vunpack.c.0.s8 %v2301
        %v2303 = vlaneseq
        %v2304 = vshrl.u32 %v2303, 7
        %v2305 = vsub.s32 %v2302, %v2304
        %v2306 = vrot.slane %v2298, %v2305
        %v2308 = vunpack.c.l.s4 1983009808
        %v2309 = vunpack.c.0.s8 %v2308
        %v2310 = vlaneseq
        %v2311 = vshrl.u32 %v2310, 7
        %v2312 = vsub.s32 %v2309, %v2311
        %v2313 = vrot.slane %v2299, %v2312
        %v2314 = vcombine.low %v2139, %v2227
        %v2315 = vcombine.high %v2139, %v2227
        %v2317 = vunpack.c.l.s4 1983009808
        %v2318 = vunpack.c.0.s8 %v2317
        %v2319 = vlaneseq
        %v2320 = vshrl.u32 %v2319, 7
        %v2321 = vsub.s32 %v2318, %v2320
        %v2322 = vrot.slane %v2314, %v2321
        %v2324 = vunpack.c.l.s4 1983009808
        %v2325 = vunpack.c.0.s8 %v2324
        %v2326 = vlaneseq
        %v2327 = vshrl.u32 %v2326, 7
        %v2328 = vsub.s32 %v2325, %v2327
        %v2329 = vrot.slane %v2315, %v2328
        %v2330 = vcombine.low %v2306, %v2322
        %v2331 = vcombine.high %v2306, %v2322
        %v2333 = vunpack.c.l.s4 1934713408
        %v2334 = vunpack.c.0.s8 %v2333
        %v2335 = vlaneseq
        %v2336 = vshrl.u32 %v2335, 7
        %v2337 = vsub.s32 %v2334, %v2336
        %v2338 = vrot.slane %v2330, %v2337
        %v2340 = vunpack.c.l.s4 1934713408
        %v2341 = vunpack.c.0.s8 %v2340
        %v2342 = vlaneseq
        %v2343 = vshrl.u32 %v2342, 7
        %v2344 = vsub.s32 %v2341, %v2343
        %v2345 = vrot.slane %v2331, %v2344
        %v2346 = vcombine.low %v2313, %v2329
        %v2347 = vcombine.high %v2313, %v2329
        %v2349 = vunpack.c.l.s4 1934713408
        %v2350 = vunpack.c.0.s8 %v2349
        %v2351 = vlaneseq
        %v2352 = vshrl.u32 %v2351, 7
        %v2353 = vsub.s32 %v2350, %v2352
        %v2354 = vrot.slane %v2346, %v2353
        %v2356 = vunpack.c.l.s4 1934713408
        %v2357 = vunpack.c.0.s8 %v2356
        %v2358 = vlaneseq
        %v2359 = vshrl.u32 %v2358, 7
        %v2360 = vsub.s32 %v2357, %v2359
        %v2361 = vrot.slane %v2347, %v2360
        %v2362 = vcombine.high %v2338, 0.0
        %v2363 = vcombine.high %v2345, 0.0
        %v2364 = vcombine.high %v2354, 0.0
        %v2365 = vcombine.high %v2361, 0.0
        %v2366 = vcombine.low %v2270, %v2277
        %v2368 = vunpack.c.l.s4 1983009808
        %v2369 = vunpack.c.0.s8 %v2368
        %v2370 = vlaneseq
        %v2371 = vshrl.u32 %v2370, 7
        %v2372 = vsub.s32 %v2369, %v2371
        %v2373 = vrot.slane %v2366, %v2372
        %v2374 = vcombine.low %v2294, %v2295
        %v2376 = vunpack.c.l.s4 1983009808
        %v2377 = vunpack.c.0.s8 %v2376
        %v2378 = vlaneseq
        %v2379 = vshrl.u32 %v2378, 7
        %v2380 = vsub.s32 %v2377, %v2379
        %v2381 = vrot.slane %v2374, %v2380
        %v2382 = vcombine.low %v2286, %v2293
        %v2384 = vunpack.c.l.s4 1983009808
        %v2385 = vunpack.c.0.s8 %v2384
        %v2386 = vlaneseq
        %v2387 = vshrl.u32 %v2386, 7
        %v2388 = vsub.s32 %v2385, %v2387
        %v2389 = vrot.slane %v2382, %v2388
        %v2390 = vcombine.low %v2296, %v2297
        %v2392 = vunpack.c.l.s4 1983009808
        %v2393 = vunpack.c.0.s8 %v2392
        %v2394 = vlaneseq
        %v2395 = vshrl.u32 %v2394, 7
        %v2396 = vsub.s32 %v2393, %v2395
        %v2397 = vrot.slane %v2390, %v2396
        %v2398 = vcombine.low %v2373, %v2381
        %v2399 = vcombine.high %v2373, %v2381
        %v2401 = vunpack.c.l.s4 1934713408
        %v2402 = vunpack.c.0.s8 %v2401
        %v2403 = vlaneseq
        %v2404 = vshrl.u32 %v2403, 7
        %v2405 = vsub.s32 %v2402, %v2404
        %v2406 = vrot.slane %v2398, %v2405
        %v2408 = vunpack.c.l.s4 1934713408
        %v2409 = vunpack.c.0.s8 %v2408
        %v2410 = vlaneseq
        %v2411 = vshrl.u32 %v2410, 7
        %v2412 = vsub.s32 %v2409, %v2411
        %v2413 = vrot.slane %v2399, %v2412
        %v2414 = vcombine.low %v2389, %v2397
        %v2415 = vcombine.high %v2389, %v2397
        %v2417 = vunpack.c.l.s4 1934713408
        %v2418 = vunpack.c.0.s8 %v2417
        %v2419 = vlaneseq
        %v2420 = vshrl.u32 %v2419, 7
        %v2421 = vsub.s32 %v2418, %v2420
        %v2422 = vrot.slane %v2414, %v2421
        %v2424 = vunpack.c.l.s4 1934713408
        %v2425 = vunpack.c.0.s8 %v2424
        %v2426 = vlaneseq
        %v2427 = vshrl.u32 %v2426, 7
        %v2428 = vsub.s32 %v2425, %v2427
        %v2429 = vrot.slane %v2415, %v2428
        %v2430 = vcombine.low %v2406, %v2422
        %v2431 = vcombine.high %v2406, %v2422
        %v2432 = vcombine.low %v2413, %v2429
        %v2433 = vcombine.high %v2413, %v2429
        %v2434 = vcombine.low %v2338, %v2345
        %v2436 = vunpack.c.l.s4 1983009808
        %v2437 = vunpack.c.0.s8 %v2436
        %v2438 = vlaneseq
        %v2439 = vshrl.u32 %v2438, 7
        %v2440 = vsub.s32 %v2437, %v2439
        %v2441 = vrot.slane %v2434, %v2440
        %v2442 = vcombine.low %v2362, %v2363
        %v2444 = vunpack.c.l.s4 1983009808
        %v2445 = vunpack.c.0.s8 %v2444
        %v2446 = vlaneseq
        %v2447 = vshrl.u32 %v2446, 7
        %v2448 = vsub.s32 %v2445, %v2447
        %v2449 = vrot.slane %v2442, %v2448
        %v2450 = vcombine.low %v2354, %v2361
        %v2452 = vunpack.c.l.s4 1983009808
        %v2453 = vunpack.c.0.s8 %v2452
        %v2454 = vlaneseq
        %v2455 = vshrl.u32 %v2454, 7
        %v2456 = vsub.s32 %v2453, %v2455
        %v2457 = vrot.slane %v2450, %v2456
        %v2458 = vcombine.low %v2364, %v2365
        %v2460 = vunpack.c.l.s4 1983009808
        %v2461 = vunpack.c.0.s8 %v2460
        %v2462 = vlaneseq
        %v2463 = vshrl.u32 %v2462, 7
        %v2464 = vsub.s32 %v2461, %v2463
        %v2465 = vrot.slane %v2458, %v2464
        %v2466 = vcombine.low %v2441, %v2449
        %v2467 = vcombine.high %v2441, %v2449
        %v2469 = vunpack.c.l.s4 1934713408
        %v2470 = vunpack.c.0.s8 %v2469
        %v2471 = vlaneseq
        %v2472 = vshrl.u32 %v2471, 7
        %v2473 = vsub.s32 %v2470, %v2472
        %v2474 = vrot.slane %v2466, %v2473
        %v2476 = vunpack.c.l.s4 1934713408
        %v2477 = vunpack.c.0.s8 %v2476
        %v2478 = vlaneseq
        %v2479 = vshrl.u32 %v2478, 7
        %v2480 = vsub.s32 %v2477, %v2479
        %v2481 = vrot.slane %v2467, %v2480
        %v2482 = vcombine.low %v2457, %v2465
        %v2483 = vcombine.high %v2457, %v2465
        %v2485 = vunpack.c.l.s4 1934713408
        %v2486 = vunpack.c.0.s8 %v2485
        %v2487 = vlaneseq
        %v2488 = vshrl.u32 %v2487, 7
        %v2489 = vsub.s32 %v2486, %v2488
        %v2490 = vrot.slane %v2482, %v2489
        %v2492 = vunpack.c.l.s4 1934713408
        %v2493 = vunpack.c.0.s8 %v2492
        %v2494 = vlaneseq
        %v2495 = vshrl.u32 %v2494, 7
        %v2496 = vsub.s32 %v2493, %v2495
        %v2497 = vrot.slane %v2483, %v2496
        %v2498 = vcombine.low %v2474, %v2490
        %v2499 = vcombine.high %v2474, %v2490
        %v2500 = vcombine.low %v2481, %v2497
        %v2501 = vcombine.high %v2481, %v2497
        %2504 = vrot.lane.b32.xlu0 %v2431, 32
        %v2505 = vpop.permute.xlu0 %2504
        %2506 = vrot.lane.b32.xlu0 %v2499, 32
        %v2507 = vpop.permute.xlu0 %2506
        %2512 = vrot.lane.b32.xlu0 %v2432, 64
        %v2513 = vpop.permute.xlu0 %2512
        %2514 = vrot.lane.b32.xlu0 %v2500, 64
        %v2515 = vpop.permute.xlu0 %2514
        %2520 = vrot.lane.b32.xlu0 %v2433, 96
        %v2521 = vpop.permute.xlu0 %2520
        %2522 = vrot.lane.b32.xlu0 %v2501, 96
        %v2523 = vpop.permute.xlu0 %2522
        %v2526 = vsel %vm1772, %v2430, %v2505
        %v2527 = vsel %vm1772, %v2498, %v2507
        %vm2528 = vcmask 523264
        %v2529 = vsel %vm2528, %v2526, %v2513
        %v2530 = vsel %vm2528, %v2527, %v2515
        %vm2531 = vcmask 785408
        %v2532 = vsel %vm2531, %v2529, %v2521
        %v2533 = vsel %vm2531, %v2530, %v2523
        %v2534 = vpack.c.bf16 %v2533, %v2532
        %v2535 = vld [vmem:[#allocation8] sm:$0xf]
        %v2536 = vld [vmem:[#allocation8 + $0x4] sm:$0xf]
        %v2537 = vld [vmem:[#allocation8 + $0x8] sm:$0xf]
        %v2538 = vld [vmem:[#allocation8 + $0xc] sm:$0xf]
        %v2539 = vld [vmem:[#allocation8 + $0x10] sm:$0xf]
        %v2540 = vld [vmem:[#allocation8 + $0x14] sm:$0xf]
        %v2541 = vld [vmem:[#allocation8 + $0x18] sm:$0xf]
        %v2542 = vld [vmem:[#allocation8 + $0x1c] sm:$0xf]
        %v2543 = vld [vmem:[#allocation8 + $0x20] sm:$0xf]
        %v2544 = vld [vmem:[#allocation8 + $0x24] sm:$0xf]
        %v2545 = vld [vmem:[#allocation8 + $0x28] sm:$0xf]
        %v2546 = vld [vmem:[#allocation8 + $0x2c] sm:$0xf]
        %v2547 = vld [vmem:[#allocation8 + $0x30] sm:$0xf]
        %v2548 = vld [vmem:[#allocation8 + $0x34] sm:$0xf]
        %v2549 = vld [vmem:[#allocation8 + $0x38] sm:$0xf]
        %v2550 = vld [vmem:[#allocation8 + $0x3c] sm:$0xf]
        %v2551 = vld [vmem:[#allocation10] sm:$0x1]
        %v2553 = vlaneseq
        %v2554 = vshrl.u32 %v2553, 7
        %v2555 = vsub.s32 0, %v2554
        %v2556 = vrot.slane %v2551, %v2555
        %v2574 = vunpack.c.l.b16 %v2535
        %v2575 = vunpack.c.l.b16 %v2536
        %v2576 = vunpack.c.l.b16 %v2537
        %v2577 = vunpack.c.l.b16 %v2538
        %v2578 = vunpack.c.l.b16 %v2539
        %v2579 = vunpack.c.l.b16 %v2540
        %v2580 = vunpack.c.l.b16 %v2541
        %v2581 = vunpack.c.l.b16 %v2542
        %v2582 = vunpack.c.l.b16 %v2543
        %v2583 = vunpack.c.l.b16 %v2544
        %v2584 = vunpack.c.l.b16 %v2545
        %v2585 = vunpack.c.l.b16 %v2546
        %v2586 = vunpack.c.l.b16 %v2547
        %v2587 = vunpack.c.l.b16 %v2548
        %v2588 = vunpack.c.l.b16 %v2549
        %v2589 = vunpack.c.l.b16 %v2550
        %v2590 = vpack.c.b16 %v2575, %v2574
        %v2591 = vpack.c.b16 %v2577, %v2576
        %v2592 = vpack.c.b16 %v2579, %v2578
        %v2593 = vpack.c.b16 %v2581, %v2580
        %v2594 = vpack.c.b16 %v2583, %v2582
        %v2595 = vpack.c.b16 %v2585, %v2584
        %v2596 = vpack.c.b16 %v2587, %v2586
        %v2597 = vpack.c.b16 %v2589, %v2588
        %2606 = vmatprep.subr.bf16.mxu0 0
        %2607 = vmatpush1.bf16.msra.mxu0 %v2590
        %2608 = vmatprep.subr.bf16.mxu0 0
        %2609 = vmatpush1.bf16.msra.mxu0 %v2591
        %2610 = vmatprep.subr.bf16.mxu0 0
        %2611 = vmatpush1.bf16.msra.mxu0 %v2592
        %2612 = vmatprep.subr.bf16.mxu0 0
        %2613 = vmatpush1.bf16.msra.mxu0 %v2593
        %2614 = vmatprep.subr.bf16.mxu0 0
        %2615 = vmatpush1.bf16.msra.mxu0 %v2594
        %2616 = vmatprep.subr.bf16.mxu0 0
        %2617 = vmatpush1.bf16.msra.mxu0 %v2595
        %2618 = vmatprep.subr.bf16.mxu0 0
        %2619 = vmatpush1.bf16.msra.mxu0 %v2596
        %2620 = vmatprep.subr.bf16.mxu0 0
        %2621 = vmatpush1.bf16.msra.mxu0 %v2597
        %2622 = vmatprep.subr.bf16.mxu0 0
        %2623 = vmatpush1.bf16.msra.mxu0 0
        %2624 = vmatprep.subr.bf16.mxu0 0
        %2625 = vmatpush1.bf16.msra.mxu0 0
        %2626 = vmatprep.subr.bf16.mxu0 0
        %2627 = vmatpush1.bf16.msra.mxu0 0
        %2628 = vmatprep.subr.bf16.mxu0 0
        %2629 = vmatpush1.bf16.msra.mxu0 0
        %2630 = vmatprep.subr.bf16.mxu0 0
        %2631 = vmatpush1.bf16.msra.mxu0 0
        %2632 = vmatprep.subr.bf16.mxu0 0
        %2633 = vmatpush1.bf16.msra.mxu0 0
        %2634 = vmatprep.subr.bf16.mxu0 0
        %2635 = vmatpush1.bf16.msra.mxu0 0
        %2636 = vmatprep.subr.bf16.mxu0 0
        %2637 = vmatpush1.bf16.msra.mxu0 0
        %2638 = vmatprep.mubr.bf16.mxu0 0
        %2639 = vmatmul.mubr.bf16.gmra.mrb[0].mxu0 %v2534
        %v2640 = vpop.f32.mrb[0].mxu0
        %v2641 = vadd.f32 %v2556, %v2640
        %v2642 = vpop.f32.mrb[0].mxu0
        %v2643 = vpop.f32.mrb[0].mxu0
        %v2644 = vadd.f32 %v2556, %v2643
        %v2645 = vpop.f32.mrb[0].mxu0
        %2646 = vdwg.mxu0
        %v2647 = vadd.f32 %v2641, %v618
        %v2648 = vadd.f32 %v2644, %v619
        %2649 = vadd.xlane.f32.xlu0 %v2647
        %v2650 = vpop.xlane.xlu0 %2649
        %2651 = vadd.xlane.f32.xlu0 %v2648
        %v2652 = vpop.xlane.xlu0 %2651
        %v2653 = vrcp.pop 128.0
        %v2654 = vmul.f32 %v2650, %v2653
        %v2655 = vmul.f32 %v2652, %v2653
        %v2656 = vmul.f32 %v2647, %v2647
        %v2657 = vmul.f32 %v2648, %v2648
        %2658 = vadd.xlane.f32.xlu0 %v2656
        %v2659 = vpop.xlane.xlu0 %2658
        %2660 = vadd.xlane.f32.xlu0 %v2657
        %v2661 = vpop.xlane.xlu0 %2660
        %v2662 = vmul.f32 %v2659, %v2653
        %v2663 = vmul.f32 %v2661, %v2653
        %v2664 = vmul.f32 %v2654, %v2654
        %v2665 = vmul.f32 %v2655, %v2655
        %v2666 = vsub.f32 %v2662, %v2664
        %v2667 = vsub.f32 %v2663, %v2665
        %v2668 = vsub.f32 %v2647, %v2654
        %v2669 = vsub.f32 %v2648, %v2655
        %v2670 = vadd.f32 %v2666, 1e-05
        %v2671 = vadd.f32 %v2667, 1e-05
        %v2672 = vrsqrt.pop %v2670
        %v2673 = vrsqrt.pop %v2671
        %v2674 = vmul.f32 %v2668, %v2672
        %v2675 = vmul.f32 %v2669, %v2673
        %v2676 = vld [vmem:[#allocation11] sm:$0x1]
        %v2678 = vlaneseq
        %v2679 = vshrl.u32 %v2678, 7
        %v2680 = vsub.s32 0, %v2679
        %v2681 = vrot.slane %v2676, %v2680
        %v2683 = vmul.f32 %v2674, %v2681
        %v2684 = vmul.f32 %v2675, %v2681
        %v2685 = vld [vmem:[#allocation13] sm:$0x1]
        %v2687 = vlaneseq
        %v2688 = vshrl.u32 %v2687, 7
        %v2689 = vsub.s32 0, %v2688
        %v2690 = vrot.slane %v2685, %v2689
        %v2692 = vadd.f32 %v2683, %v2690
        %v2693 = vadd.f32 %v2684, %v2690
        %v2694 = vpack.c.bf16 %v2693, %v2692
        %v2695 = vld [vmem:[#allocation14] sm:$0xff]
        %v2696 = vld [vmem:[#allocation14 + $0x8] sm:$0xff]
        %v2697 = vld [vmem:[#allocation14 + $0x10] sm:$0xff]
        %v2698 = vld [vmem:[#allocation14 + $0x18] sm:$0xff]
        %v2699 = vld [vmem:[#allocation14 + $0x20] sm:$0xff]
        %v2700 = vld [vmem:[#allocation14 + $0x28] sm:$0xff]
        %v2701 = vld [vmem:[#allocation14 + $0x30] sm:$0xff]
        %v2702 = vld [vmem:[#allocation14 + $0x38] sm:$0xff]
        %v2703 = vld [vmem:[#allocation14 + $0x40] sm:$0xff]
        %v2704 = vld [vmem:[#allocation14 + $0x48] sm:$0xff]
        %v2705 = vld [vmem:[#allocation14 + $0x50] sm:$0xff]
        %v2706 = vld [vmem:[#allocation14 + $0x58] sm:$0xff]
        %v2707 = vld [vmem:[#allocation14 + $0x60] sm:$0xff]
        %v2708 = vld [vmem:[#allocation14 + $0x68] sm:$0xff]
        %v2709 = vld [vmem:[#allocation14 + $0x70] sm:$0xff]
        %v2710 = vld [vmem:[#allocation14 + $0x78] sm:$0xff]
        %v2711 = vld [vmem:[#allocation16] sm:$0x3]
        %v2713 = vlaneseq
        %v2714 = vshrl.u32 %v2713, 7
        %v2715 = vsub.s32 0, %v2714
        %v2716 = vrot.slane %v2711, %v2715
        %v2717 = vlaneseq
        %v2718 = vshrl.u32 %v2717, 7
        %v2719 = vsub.s32 1, %v2718
        %v2720 = vrot.slane %v2711, %v2719
        %v2739 = vunpack.c.l.b16 %v2695
        %v2740 = vunpack.c.h.b16 %v2695
        %v2741 = vunpack.c.l.b16 %v2696
        %v2742 = vunpack.c.h.b16 %v2696
        %v2743 = vunpack.c.l.b16 %v2697
        %v2744 = vunpack.c.h.b16 %v2697
        %v2745 = vunpack.c.l.b16 %v2698
        %v2746 = vunpack.c.h.b16 %v2698
        %v2747 = vunpack.c.l.b16 %v2699
        %v2748 = vunpack.c.h.b16 %v2699
        %v2749 = vunpack.c.l.b16 %v2700
        %v2750 = vunpack.c.h.b16 %v2700
        %v2751 = vunpack.c.l.b16 %v2701
        %v2752 = vunpack.c.h.b16 %v2701
        %v2753 = vunpack.c.l.b16 %v2702
        %v2754 = vunpack.c.h.b16 %v2702
        %v2755 = vunpack.c.l.b16 %v2703
        %v2756 = vunpack.c.h.b16 %v2703
        %v2757 = vunpack.c.l.b16 %v2704
        %v2758 = vunpack.c.h.b16 %v2704
        %v2759 = vunpack.c.l.b16 %v2705
        %v2760 = vunpack.c.h.b16 %v2705
        %v2761 = vunpack.c.l.b16 %v2706
        %v2762 = vunpack.c.h.b16 %v2706
        %v2763 = vunpack.c.l.b16 %v2707
        %v2764 = vunpack.c.h.b16 %v2707
        %v2765 = vunpack.c.l.b16 %v2708
        %v2766 = vunpack.c.h.b16 %v2708
        %v2767 = vunpack.c.l.b16 %v2709
        %v2768 = vunpack.c.h.b16 %v2709
        %v2769 = vunpack.c.l.b16 %v2710
        %v2770 = vunpack.c.h.b16 %v2710
        %v2771 = vpack.c.b16 %v2741, %v2739
        %v2772 = vpack.c.b16 %v2742, %v2740
        %v2773 = vpack.c.b16 %v2745, %v2743
        %v2774 = vpack.c.b16 %v2746, %v2744
        %v2775 = vpack.c.b16 %v2749, %v2747
        %v2776 = vpack.c.b16 %v2750, %v2748
        %v2777 = vpack.c.b16 %v2753, %v2751
        %v2778 = vpack.c.b16 %v2754, %v2752
        %v2779 = vpack.c.b16 %v2757, %v2755
        %v2780 = vpack.c.b16 %v2758, %v2756
        %v2781 = vpack.c.b16 %v2761, %v2759
        %v2782 = vpack.c.b16 %v2762, %v2760
        %v2783 = vpack.c.b16 %v2765, %v2763
        %v2784 = vpack.c.b16 %v2766, %v2764
        %v2785 = vpack.c.b16 %v2769, %v2767
        %v2786 = vpack.c.b16 %v2770, %v2768
        %2803 = vmatprep.subr.bf16.mxu0 %v2772
        %2804 = vmatpush1.bf16.msra.mxu0 %v2771
        %2805 = vmatprep.subr.bf16.mxu0 %v2774
        %2806 = vmatpush1.bf16.msra.mxu0 %v2773
        %2807 = vmatprep.subr.bf16.mxu0 %v2776
        %2808 = vmatpush1.bf16.msra.mxu0 %v2775
        %2809 = vmatprep.subr.bf16.mxu0 %v2778
        %2810 = vmatpush1.bf16.msra.mxu0 %v2777
        %2811 = vmatprep.subr.bf16.mxu0 %v2780
        %2812 = vmatpush1.bf16.msra.mxu0 %v2779
        %2813 = vmatprep.subr.bf16.mxu0 %v2782
        %2814 = vmatpush1.bf16.msra.mxu0 %v2781
        %2815 = vmatprep.subr.bf16.mxu0 %v2784
        %2816 = vmatpush1.bf16.msra.mxu0 %v2783
        %2817 = vmatprep.subr.bf16.mxu0 %v2786
        %2818 = vmatpush1.bf16.msra.mxu0 %v2785
        %2819 = vmatprep.subr.bf16.mxu0 0
        %2820 = vmatpush1.bf16.msra.mxu0 0
        %2821 = vmatprep.subr.bf16.mxu0 0
        %2822 = vmatpush1.bf16.msra.mxu0 0
        %2823 = vmatprep.subr.bf16.mxu0 0
        %2824 = vmatpush1.bf16.msra.mxu0 0
        %2825 = vmatprep.subr.bf16.mxu0 0
        %2826 = vmatpush1.bf16.msra.mxu0 0
        %2827 = vmatprep.subr.bf16.mxu0 0
        %2828 = vmatpush1.bf16.msra.mxu0 0
        %2829 = vmatprep.subr.bf16.mxu0 0
        %2830 = vmatpush1.bf16.msra.mxu0 0
        %2831 = vmatprep.subr.bf16.mxu0 0
        %2832 = vmatpush1.bf16.msra.mxu0 0
        %2833 = vmatprep.subr.bf16.mxu0 0
        %2834 = vmatpush1.bf16.msra.mxu0 0
        %2835 = vmatprep.mubr.bf16.mxu0 0
        %2836 = vmatmul.mubr.bf16.gmra.mrb[0].mxu0 %v2694
        %v2837 = vpop.f32.mrb[0].mxu0
        %v2838 = vadd.f32 %v2716, %v2837
        %v2839 = vpop.f32.mrb[0].mxu0
        %v2840 = vadd.f32 %v2720, %v2839
        %v2841 = vpop.f32.mrb[0].mxu0
        %v2842 = vadd.f32 %v2716, %v2841
        %v2843 = vpop.f32.mrb[0].mxu0
        %v2844 = vadd.f32 %v2720, %v2843
        %2845 = vdwg.mxu0
        %v2846 = vmax.f32 %v2838, 0.0
        %v2847 = vmax.f32 %v2840, 0.0
        %v2848 = vmax.f32 %v2842, 0.0
        %v2849 = vmax.f32 %v2844, 0.0
        %v2850 = vpack.c.bf16 %v2848, %v2846
        %v2851 = vpack.c.bf16 %v2849, %v2847
        %v2852 = vld [vmem:[#allocation17] sm:$0xf]
        %v2853 = vld [vmem:[#allocation17 + $0x4] sm:$0xf]
        %v2854 = vld [vmem:[#allocation17 + $0x8] sm:$0xf]
        %v2855 = vld [vmem:[#allocation17 + $0xc] sm:$0xf]
        %v2856 = vld [vmem:[#allocation17 + $0x10] sm:$0xf]
        %v2857 = vld [vmem:[#allocation17 + $0x14] sm:$0xf]
        %v2858 = vld [vmem:[#allocation17 + $0x18] sm:$0xf]
        %v2859 = vld [vmem:[#allocation17 + $0x1c] sm:$0xf]
        %v2860 = vld [vmem:[#allocation17 + $0x20] sm:$0xf]
        %v2861 = vld [vmem:[#allocation17 + $0x24] sm:$0xf]
        %v2862 = vld [vmem:[#allocation17 + $0x28] sm:$0xf]
        %v2863 = vld [vmem:[#allocation17 + $0x2c] sm:$0xf]
        %v2864 = vld [vmem:[#allocation17 + $0x30] sm:$0xf]
        %v2865 = vld [vmem:[#allocation17 + $0x34] sm:$0xf]
        %v2866 = vld [vmem:[#allocation17 + $0x38] sm:$0xf]
        %v2867 = vld [vmem:[#allocation17 + $0x3c] sm:$0xf]
        %v2868 = vld [vmem:[#allocation17 + $0x40] sm:$0xf]
        %v2869 = vld [vmem:[#allocation17 + $0x44] sm:$0xf]
        %v2870 = vld [vmem:[#allocation17 + $0x48] sm:$0xf]
        %v2871 = vld [vmem:[#allocation17 + $0x4c] sm:$0xf]
        %v2872 = vld [vmem:[#allocation17 + $0x50] sm:$0xf]
        %v2873 = vld [vmem:[#allocation17 + $0x54] sm:$0xf]
        %v2874 = vld [vmem:[#allocation17 + $0x58] sm:$0xf]
        %v2875 = vld [vmem:[#allocation17 + $0x5c] sm:$0xf]
        %v2876 = vld [vmem:[#allocation17 + $0x60] sm:$0xf]
        %v2877 = vld [vmem:[#allocation17 + $0x64] sm:$0xf]
        %v2878 = vld [vmem:[#allocation17 + $0x68] sm:$0xf]
        %v2879 = vld [vmem:[#allocation17 + $0x6c] sm:$0xf]
        %v2880 = vld [vmem:[#allocation17 + $0x70] sm:$0xf]
        %v2881 = vld [vmem:[#allocation17 + $0x74] sm:$0xf]
        %v2882 = vld [vmem:[#allocation17 + $0x78] sm:$0xf]
        %v2883 = vld [vmem:[#allocation17 + $0x7c] sm:$0xf]
        %v2884 = vld [vmem:[#allocation19] sm:$0x1]
        %v2886 = vlaneseq
        %v2887 = vshrl.u32 %v2886, 7
        %v2888 = vsub.s32 0, %v2887
        %v2889 = vrot.slane %v2884, %v2888
        %v2923 = vunpack.c.l.b16 %v2852
        %v2924 = vunpack.c.l.b16 %v2853
        %v2925 = vunpack.c.l.b16 %v2854
        %v2926 = vunpack.c.l.b16 %v2855
        %v2927 = vunpack.c.l.b16 %v2856
        %v2928 = vunpack.c.l.b16 %v2857
        %v2929 = vunpack.c.l.b16 %v2858
        %v2930 = vunpack.c.l.b16 %v2859
        %v2931 = vunpack.c.l.b16 %v2860
        %v2932 = vunpack.c.l.b16 %v2861
        %v2933 = vunpack.c.l.b16 %v2862
        %v2934 = vunpack.c.l.b16 %v2863
        %v2935 = vunpack.c.l.b16 %v2864
        %v2936 = vunpack.c.l.b16 %v2865
        %v2937 = vunpack.c.l.b16 %v2866
        %v2938 = vunpack.c.l.b16 %v2867
        %v2939 = vunpack.c.l.b16 %v2868
        %v2940 = vunpack.c.l.b16 %v2869
        %v2941 = vunpack.c.l.b16 %v2870
        %v2942 = vunpack.c.l.b16 %v2871
        %v2943 = vunpack.c.l.b16 %v2872
        %v2944 = vunpack.c.l.b16 %v2873
        %v2945 = vunpack.c.l.b16 %v2874
        %v2946 = vunpack.c.l.b16 %v2875
        %v2947 = vunpack.c.l.b16 %v2876
        %v2948 = vunpack.c.l.b16 %v2877
        %v2949 = vunpack.c.l.b16 %v2878
        %v2950 = vunpack.c.l.b16 %v2879
        %v2951 = vunpack.c.l.b16 %v2880
        %v2952 = vunpack.c.l.b16 %v2881
        %v2953 = vunpack.c.l.b16 %v2882
        %v2954 = vunpack.c.l.b16 %v2883
        %v2955 = vpack.c.b16 %v2924, %v2923
        %v2956 = vpack.c.b16 %v2926, %v2925
        %v2957 = vpack.c.b16 %v2928, %v2927
        %v2958 = vpack.c.b16 %v2930, %v2929
        %v2959 = vpack.c.b16 %v2932, %v2931
        %v2960 = vpack.c.b16 %v2934, %v2933
        %v2961 = vpack.c.b16 %v2936, %v2935
        %v2962 = vpack.c.b16 %v2938, %v2937
        %v2963 = vpack.c.b16 %v2940, %v2939
        %v2964 = vpack.c.b16 %v2942, %v2941
        %v2965 = vpack.c.b16 %v2944, %v2943
        %v2966 = vpack.c.b16 %v2946, %v2945
        %v2967 = vpack.c.b16 %v2948, %v2947
        %v2968 = vpack.c.b16 %v2950, %v2949
        %v2969 = vpack.c.b16 %v2952, %v2951
        %v2970 = vpack.c.b16 %v2954, %v2953
        %2987 = vmatprep.subr.bf16.mxu0 0
        %2988 = vmatpush1.bf16.msra.mxu0 %v2955
        %2989 = vmatprep.subr.bf16.mxu0 0
        %2990 = vmatpush1.bf16.msra.mxu0 %v2956
        %2991 = vmatprep.subr.bf16.mxu0 0
        %2992 = vmatpush1.bf16.msra.mxu0 %v2957
        %2993 = vmatprep.subr.bf16.mxu0 0
        %2994 = vmatpush1.bf16.msra.mxu0 %v2958
        %2995 = vmatprep.subr.bf16.mxu0 0
        %2996 = vmatpush1.bf16.msra.mxu0 %v2959
        %2997 = vmatprep.subr.bf16.mxu0 0
        %2998 = vmatpush1.bf16.msra.mxu0 %v2960
        %2999 = vmatprep.subr.bf16.mxu0 0
        %3000 = vmatpush1.bf16.msra.mxu0 %v2961
        %3001 = vmatprep.subr.bf16.mxu0 0
        %3002 = vmatpush1.bf16.msra.mxu0 %v2962
        %3003 = vmatprep.subr.bf16.mxu0 0
        %3004 = vmatpush1.bf16.msra.mxu0 %v2963
        %3005 = vmatprep.subr.bf16.mxu0 0
        %3006 = vmatpush1.bf16.msra.mxu0 %v2964
        %3007 = vmatprep.subr.bf16.mxu0 0
        %3008 = vmatpush1.bf16.msra.mxu0 %v2965
        %3009 = vmatprep.subr.bf16.mxu0 0
        %3010 = vmatpush1.bf16.msra.mxu0 %v2966
        %3011 = vmatprep.subr.bf16.mxu0 0
        %3012 = vmatpush1.bf16.msra.mxu0 %v2967
        %3013 = vmatprep.subr.bf16.mxu0 0
        %3014 = vmatpush1.bf16.msra.mxu0 %v2968
        %3015 = vmatprep.subr.bf16.mxu0 0
        %3016 = vmatpush1.bf16.msra.mxu0 %v2969
        %3017 = vmatprep.subr.bf16.mxu0 0
        %3018 = vmatpush1.bf16.msra.mxu0 %v2970
        %3019 = vmatprep.mubr.bf16.mxu0 %v2851
        %3020 = vmatmul.mubr.bf16.gmra.mrb[0].mxu0 %v2850
        %v3021 = vpop.f32.mrb[0].mxu0
        %v3022 = vadd.f32 %v2889, %v3021
        %v3023 = vpop.f32.mrb[0].mxu0
        %v3024 = vpop.f32.mrb[0].mxu0
        %v3025 = vadd.f32 %v2889, %v3024
        %v3026 = vpop.f32.mrb[0].mxu0
        %3027 = vdwg.mxu0
        %v3028 = vadd.f32 %v3022, %v2692
        %v3029 = vadd.f32 %v3025, %v2693
        %3030 = vadd.xlane.f32.xlu0 %v3028
        %v3031 = vpop.xlane.xlu0 %3030
        %3032 = vadd.xlane.f32.xlu0 %v3029
        %v3033 = vpop.xlane.xlu0 %3032
        %v3034 = vmul.f32 %v3031, %v2653
        %v3035 = vmul.f32 %v3033, %v2653
        %v3036 = vmul.f32 %v3028, %v3028
        %v3037 = vmul.f32 %v3029, %v3029
        %3038 = vadd.xlane.f32.xlu0 %v3036
        %v3039 = vpop.xlane.xlu0 %3038
        %3040 = vadd.xlane.f32.xlu0 %v3037
        %v3041 = vpop.xlane.xlu0 %3040
        %v3042 = vmul.f32 %v3039, %v2653
        %v3043 = vmul.f32 %v3041, %v2653
        %v3044 = vmul.f32 %v3034, %v3034
        %v3045 = vmul.f32 %v3035, %v3035
        %v3046 = vsub.f32 %v3042, %v3044
        %v3047 = vsub.f32 %v3043, %v3045
        %v3048 = vsub.f32 %v3028, %v3034
        %v3049 = vsub.f32 %v3029, %v3035
        %v3050 = vadd.f32 %v3046, 1e-05
        %v3051 = vadd.f32 %v3047, 1e-05
        %v3052 = vrsqrt.pop %v3050
        %v3053 = vrsqrt.pop %v3051
        %v3054 = vmul.f32 %v3048, %v3052
        %v3055 = vmul.f32 %v3049, %v3053
        %v3056 = vld [vmem:[#allocation20] sm:$0x1]
        %v3058 = vlaneseq
        %v3059 = vshrl.u32 %v3058, 7
        %v3060 = vsub.s32 0, %v3059
        %v3061 = vrot.slane %v3056, %v3060
        %v3063 = vmul.f32 %v3054, %v3061
        %v3064 = vmul.f32 %v3055, %v3061
        %v3065 = vld [vmem:[#allocation22] sm:$0x1]
        %v3067 = vlaneseq
        %v3068 = vshrl.u32 %v3067, 7
        %v3069 = vsub.s32 0, %v3068
        %v3070 = vrot.slane %v3065, %v3069
        %v3072 = vadd.f32 %v3063, %v3070
        %v3073 = vadd.f32 %v3064, %v3070
        %3074 = vst [vmem:[%s616] sm:$0xff] %v3072
        %3075 = vst [vmem:[%s616 + $0x8] sm:$0xff] %v3073
        %s3076 = sand.u32 %s322, 1
        %s3077 = scalar_lea.sflag [#allocation4], %s3076
        %s3078 = sand.u32 %s322, 1
        %s3079 = smul.addr %s3078, 16
        %s3080 = scalar_lea.vmem [#allocation23], %s3079
        // Predicated region
        $region125: #{tpu_custom_call.1} parent=71 // pred_check
          %p3081 = pneg %p332
        $region126: #{tpu_custom_call.1} parent=71 // pred_check_branch
          %3083 = sbr.rel (%p3081) target = $region128
        $region127: #{tpu_custom_call.1} parent=71 // pred_region
          %s3085 = ssub.s32 256, 256
          %3086 = vsyncadd %s3077, %s3085
          %s3087 = smul.addr %s36, 2
          %s3088 = smul.addr %s3087, 128
          %s3089 = scalar_lea.hbm %s13, %s3088
          %s3090 = sshll.u32 %s3080, 4
          %s3091 = int_to_ptr.vmem [resolvable:$true] %s3090
          %3096 = dma.vmem_to_hbm [thread:$0]  %s3091, 256, %s3089, %s3077, 128, 128, 8
        $region128: #{tpu_custom_call.1} parent=71 // pred_fallthru
          _
      $region72: #{tpu_custom_call.1} parent=5 // pred_fallthru
        _
      %p3097 = scmp.le.s32.totalorder 2, %s31
      // Predicated region
      $region129: #{tpu_custom_call.1} parent=5 // pred_check
        %p3098 = pneg %p3097
      $region130: #{tpu_custom_call.1} parent=5 // pred_check_branch
        %3100 = sbr.rel (%p3098) target = $region132
      $region131: #{tpu_custom_call.1} parent=5 // pred_region
        %s3101 = ssub.s32 %s31, 2
        // Predicated region
        $region133: #{tpu_custom_call.1} parent=131 // pred_check
          %p3102 = pneg %p338
        $region134: #{tpu_custom_call.1} parent=131 // pred_check_branch
          %3104 = sbr.rel (%p3102) target = $region136
        $region135: #{tpu_custom_call.1} parent=131 // pred_region
          %s3105 = sand.u32 %s323, 1
          %s3106 = scalar_lea.sflag [#allocation4], %s3105
          %s3107 = sand.u32 %s323, 1
          %s3108 = smul.addr %s3107, 16
          %s3109 = scalar_lea.vmem [#allocation23], %s3108
          %3110 = dma.done %s3106, 256
        $region136: #{tpu_custom_call.1} parent=131 // pred_fallthru
          _
      $region132: #{tpu_custom_call.1} parent=5 // pred_fallthru
        _
    $region6: #{tpu_custom_call.1} parent=1 // loop_footer
      %s35 = sadd.s32 1, %s31
    $region7: #{tpu_custom_call.1} parent=1 // loop_footer_branch
      %30 = sbr.rel target = $region3
    $region8: #{tpu_custom_call.1} parent=1 // loop_exit
      _
    %3111 = vsyncpa [#allocation3], 1
    %s3112 = scalar_lea.sflag [#allocation3], 1
    %3113 = vsyncpa %s3112, 1
    %3114 = vsyncpa [#allocation6], 1
    %3115 = vsyncpa [#allocation9], 1
    %3116 = vsyncpa [#allocation12], 1
    %3117 = vsyncpa [#allocation15], 1
    %3118 = vsyncpa [#allocation18], 1
    %3119 = vsyncpa [#allocation21], 1
    %3120 = vsyncpa [#allocation4], 1
    %s3121 = scalar_lea.sflag [#allocation4], 1
    %3122 = vsyncpa %s3121, 1

</llo_original>
